<compile_context>
chip_gen: v7x
topology: tpu7x:2x2x1
jax: 0.10.0
libtpu: 0.0.40
codegen_flags: <defaults>
</compile_context>

<pallas_src>
import math

import jax
import jax.numpy as jnp
from jax import lax
from jax.experimental import pallas as pl
from jax.experimental.pallas import tpu as pltpu


# ----------------------------------------------------------------------------
# Small helpers
# ----------------------------------------------------------------------------
def _round_up(x, m):
    return ((x + m - 1) // m) * m


def _gelu(x):
    """tanh-approx GELU (== torch.nn.GELU(approximate='tanh')); tanh -> EUP slot."""
    c = 0.7978845608028654  # sqrt(2/pi)
    return 0.5 * x * (1.0 + jnp.tanh(c * (x + 0.044715 * (x * x * x))))


def _pack_rows(entries, dtype):
    """Stack 2-D arrays vertically into one (rows, lanes) buffer of `dtype`.

    Each section starts at a sublane-tile-aligned row offset (8 rows for f32,
    16 for bf16) so in-kernel static slices never straddle packed tiles.
    Returns (buffer, {name: (row_offset, n_rows, n_cols)}).
    """
    itemsize = jnp.dtype(dtype).itemsize
    align = max(8, 32 // itemsize)
    meta, off, lanes = {}, 0, 0
    for name, a in entries:
        r, c = a.shape
        off = _round_up(off, align)
        meta[name] = (off, r, c)
        off += r
        lanes = max(lanes, c)
    rows = _round_up(off, align)
    lanes = _round_up(lanes, 128)
    buf = jnp.zeros((rows, lanes), dtype)
    for name, a in entries:
        o, r, c = meta[name]
        buf = buf.at[o:o + r, :c].set(a.astype(dtype))
    return buf, meta


# ----------------------------------------------------------------------------
# Kernel factory: encoder (3x fused Conv1d+GELU, avg-pool) + StepOperator MLP
# ----------------------------------------------------------------------------
def _make_kernel(wmeta, cmeta, *, cin, batch, tau_off):
    def kernel(data_ref, w_ref, c_ref, out_ref):
        # Static ref-slice carving of the packed buffers (no extra DMAs).
        def W(name):
            o, r, c = wmeta[name]
            return w_ref[o:o + r, 0:c]

        def C(name):
            o, r, c = cmeta[name]
            return c_ref[o:o + r, 0:c]

        R = data_ref.shape[1]
        mnf = C("mnf")          # (1, R)  1.0 except at segment starts
        mnl = C("mnl")          # (1, R)  1.0 except at segment ends

        def conv1d_gelu(xin, w, bias):
            # Conv1d(kernel=3, padding=1) over the lane (time) axis, per
            # length-S segment.  All three taps in ONE matmul; boundary fixup
            # via lane-roll (XLU) + precomputed 0/1 masks.  Incremental
            # accumulation keeps the live vreg set small.
            cout = w.shape[0] // 3
            if xin.shape[0] <= 4:
                # Tiny-K first layer: broadcast outer products (VALU), f32.
                y = w[:, 0:1].astype(jnp.float32) * xin[0:1, :]
                for kk in range(1, xin.shape[0]):
                    y = y + w[:, kk:kk + 1].astype(jnp.float32) * xin[kk:kk + 1, :]
            else:
                y = jnp.dot(w, xin.astype(w.dtype),
                            preferred_element_type=jnp.float32)   # (3*Cout, R)
            acc = y[cout:2 * cout]                                 # tap @ x[:, l]
            if bias is not None:
                acc = acc + bias
            acc = acc + mnf * pltpu.roll(y[:cout], shift=1, axis=1)        # x[:, l-1]
            acc = acc + mnl * pltpu.roll(y[2 * cout:], shift=R - 1, axis=1)  # x[:, l+1]
            return _gelu(acc)

        # --- SimpleHistEncoder.net : 3 x (Conv1d + GELU), channel-major -------
        x_aug = data_ref[0:cin + 1, :]                 # (Cin+1, R): data + ones row
        z = conv1d_gelu(x_aug, W("cw0"), None)         # conv0 bias folded into cw0
        z = conv1d_gelu(z, W("cw1"), C("cb1"))         # (H, R)
        z = conv1d_gelu(z, W("cw2"), C("cb2"))         # (H, R)

        # --- AdaptiveAvgPool1d(1): z (H,R) @ pool_t (R,B) -> (H,B), f32 -------
        # (pool matrix pre-transposed so the big activation is never transposed)
        hv_t = jnp.dot(z, C("pool_t"), preferred_element_type=jnp.float32)

        # --- StepOperator (batch-major head; hidden dims lane-dense) ----------
        tau = data_ref[tau_off:tau_off + batch, 0:1]                   # (B, 1)
        t1 = _gelu(tau * C("tw1") + C("tb1"))                          # (B, Td)
        t2 = _gelu(jnp.dot(t1, C("tw2"),
                           preferred_element_type=jnp.float32) + C("tb2"))

        pwt = W("pwt")
        pw2 = W("pw2")
        # predictor L1 on concat([h_vec, tau_e]) as split matmuls; the history
        # part contracts the tiny (H, B) hv_t on its first axis (transposed LHS).
        h1 = _gelu(
            lax.dot_general(hv_t, C("pwh"), (((0,), (0,)), ((), ())),
                            preferred_element_type=jnp.float32)
            + jnp.dot(t2.astype(pwt.dtype), pwt,
                      preferred_element_type=jnp.float32)
            + C("pb1"))                                                # (B, P)
        h2 = _gelu(jnp.dot(h1.astype(pw2.dtype), pw2,
                           preferred_element_type=jnp.float32) + C("pb2"))
        out = jnp.dot(h2, C("pw3"),
                      preferred_element_type=jnp.float32) + C("pb3")   # (B, OD)
        out_ref[...] = out.astype(out_ref.dtype)

    return kernel


# ----------------------------------------------------------------------------
# Plain-JAX glue
# ----------------------------------------------------------------------------
def resample_history(h, S):
    """Linear resampling of (B, H_hist, C) -> (B, S, C). Identity if H_hist == S."""
    B, H, C = h.shape
    if H == S:
        return h
    idx = jnp.linspace(0.0, H - 1, S)
    f = jnp.clip(jnp.floor(idx), 0, H - 1).astype(jnp.int32)
    c = jnp.clip(jnp.ceil(idx), 0, H - 1).astype(jnp.int32)
    w = (idx - jnp.floor(idx))[None, :, None]
    return (1.0 - w) * h[:, f, :] + w * h[:, c, :]


def init_torch_params(key, *, in_channels=1, hist_hidden=64, tau_dim=16,
                      predictor_hidden=128, out_len=32, out_channels=1):
    """Synthetic params in PyTorch state_dict layout (uniform(+-1/sqrt(fan_in)))."""
    H, Td, P = hist_hidden, tau_dim, predictor_hidden
    OD = out_len * out_channels
    ks = jax.random.split(key, 16)

    def u(k, shape, fan_in):
        b = 1.0 / math.sqrt(fan_in)
        return jax.random.uniform(k, shape, jnp.float32, -b, b)

    return {
        "conv0.w": u(ks[0], (H, in_channels, 3), 3 * in_channels),
        "conv0.b": u(ks[1], (H,), 3 * in_channels),
        "conv1.w": u(ks[2], (H, H, 3), 3 * H),
        "conv1.b": u(ks[3], (H,), 3 * H),
        "conv2.w": u(ks[4], (H, H, 3), 3 * H),
        "conv2.b": u(ks[5], (H,), 3 * H),
        "tau1.w": u(ks[6], (Td, 1), 1),
        "tau1.b": u(ks[7], (Td,), 1),
        "tau2.w": u(ks[8], (Td, Td), Td),
        "tau2.b": u(ks[9], (Td,), Td),
        "pred1.w": u(ks[10], (P, H + Td), H + Td),
        "pred1.b": u(ks[11], (P,), H + Td),
        "pred2.w": u(ks[12], (P, P), P),
        "pred2.b": u(ks[13], (P,), P),
        "pred3.w": u(ks[14], (OD, P), P),
        "pred3.b": u(ks[15], (OD,), P),
    }


def prepare_kernel_params(tp, *, B, S, matmul_dtype=jnp.float32):
    """Pack params + per-(B,S) constants into two buffers (one DMA each).

    `matmul_dtype=jnp.bfloat16` stores the MXU-heavy weights (conv taps,
    predictor L1-tau and L2) in bf16 (native MXU dtype on v5e/v6e/v7x); pool,
    pred1-hist and pred3 stay f32 to limit accumulated error.
    """
    H, Cin = tp["conv0.w"].shape[0], tp["conv0.w"].shape[1]
    Td = tp["tau1.w"].shape[0]
    P = tp["pred1.w"].shape[0]
    OD = tp["pred3.w"].shape[0]
    assert tp["pred1.w"].shape[1] == H + Td
    R = B * S

    def conv_w(w):  # (Cout, Cin, 3) -> (3*Cout, Cin), rows grouped by tap
        return jnp.transpose(w, (2, 0, 1)).reshape(3 * w.shape[0], w.shape[1])

    # conv0 with bias folded: extra input column pairs with the ones row in x.
    w0 = conv_w(tp["conv0.w"])                                      # (3H, Cin)
    w0_aug = jnp.concatenate([w0, jnp.zeros((3 * H, 1), jnp.float32)], axis=1)
    w0_aug = w0_aug.at[H:2 * H, Cin].set(tp["conv0.b"])             # tap-1 column

    w_entries = [
        ("cw0", w0_aug),                       # (3H, Cin+1)
        ("cw1", conv_w(tp["conv1.w"])),        # (3H, H)
        ("cw2", conv_w(tp["conv2.w"])),        # (3H, H)
        ("pwt", tp["pred1.w"][:, H:].T),       # (Td, P)
        ("pw2", tp["pred2.w"].T),              # (P, P)
    ]
    wbuf, wmeta = _pack_rows(w_entries, matmul_dtype)

    seg = jnp.arange(R, dtype=jnp.int32) % S
    mnf = (seg != 0).astype(jnp.float32).reshape(1, R)
    mnl = (seg != (S - 1)).astype(jnp.float32).reshape(1, R)
    pool_t = (jnp.repeat(jnp.eye(B, dtype=jnp.float32), S, axis=1) / float(S)).T  # (R, B)

    c_entries = [
        ("mnf", mnf), ("mnl", mnl), ("pool_t", pool_t),
        ("cb1", tp["conv1.b"].reshape(-1, 1)),
        ("cb2", tp["conv2.b"].reshape(-1, 1)),
        ("tw1", tp["tau1.w"].T), ("tb1", tp["tau1.b"].reshape(1, -1)),
        ("tw2", tp["tau2.w"].T), ("tb2", tp["tau2.b"].reshape(1, -1)),
        ("pwh", tp["pred1.w"][:, :H].T),       # (H, P), kept f32
        ("pb1", tp["pred1.b"].reshape(1, -1)),
        ("pb2", tp["pred2.b"].reshape(1, -1)),
        ("pw3", tp["pred3.w"].T),              # (P, OD), kept f32
        ("pb3", tp["pred3.b"].reshape(1, -1)),
    ]
    cbuf, cmeta = _pack_rows(c_entries, jnp.float32)

    dims = dict(B=B, S=S, Cin=Cin, H=H, Td=Td, P=P, OD=OD)
    return {"wbuf": wbuf, "wmeta": wmeta, "cbuf": cbuf, "cmeta": cmeta, "dims": dims}


def method_of_steps_forward(hist, tau, packed, *, out_channels=1):
    """Equivalent of MethodOfStepsModel.forward(hist, tau) (tanh-GELU variant)."""
    dims = packed["dims"]
    B, S, Cin, OD = dims["B"], dims["S"], dims["Cin"], dims["OD"]
    H, Td, P = dims["H"], dims["Td"], dims["P"]
    assert hist.shape[0] == B and hist.shape[2] == Cin
    R = B * S

    h_res = resample_history(hist.astype(jnp.float32), S)            # (B, S, Cin)
    # channel-major flat layout: x[c, b*S + s] = h_res[b, s, c]
    x_cm = jnp.transpose(h_res, (2, 0, 1)).reshape(Cin, R)

    # Per-call data buffer (single DMA): x rows, a ones row (conv0 bias fold),
    # and tau in column 0 of an 8-aligned row block.
    tau_off = _round_up(Cin + 1, 8)
    data_rows = tau_off + _round_up(B, 8)
    data = jnp.zeros((data_rows, R), jnp.float32)
    data = data.at[:Cin, :].set(x_cm)
    data = data.at[Cin, :].set(1.0)
    data = data.at[tau_off:tau_off + B, 0].set(
        jnp.reshape(tau, (-1,)).astype(jnp.float32))

    kernel = _make_kernel(packed["wmeta"], packed["cmeta"],
                          cin=Cin, batch=B, tau_off=tau_off)

    flops = int(
        2 * R * (3 * H * (Cin + 1) + 2 * 3 * H * H)          # fused conv taps
        + 2 * H * R * B                                       # avg-pool matmul
        + 2 * B * (Td + Td * Td + H * P + Td * P + P * P + P * OD))
    transcendentals = int(3 * H * R + B * (2 * Td + 2 * P))   # tanh count
    bytes_accessed = int(
        data.size * 4
        + packed["wbuf"].size * jnp.dtype(packed["wbuf"].dtype).itemsize
        + packed["cbuf"].size * 4
        + B * OD * 4)

    out = pl.pallas_call(
        kernel,
        out_shape=jax.ShapeDtypeStruct((B, OD), jnp.float32),
        in_specs=[pl.BlockSpec(memory_space=pltpu.MemorySpace.VMEM)] * 3,
        out_specs=pl.BlockSpec(memory_space=pltpu.MemorySpace.VMEM),
        cost_estimate=pl.CostEstimate(flops=flops,
                                      transcendentals=transcendentals,
                                      bytes_accessed=bytes_accessed),
    )(data, packed["wbuf"], packed["cbuf"])
    return out.reshape(B, OD // out_channels, out_channels)


# ----------------------------------------------------------------------------
# Pure-JAX reference (same tanh-GELU) for correctness checks
# ----------------------------------------------------------------------------
def _reference_forward(hist, tau, tp, *, S=32, step_out=32, out_channels=1):
    h = resample_history(hist.astype(jnp.float32), S)           # (B, S, Cin)
    x = jnp.transpose(h, (0, 2, 1))                              # (B, Cin, S)

    def conv1d(x, w, b):  # torch Conv1d(kernel=3, padding=1), NCW
        y = lax.conv_general_dilated(
            x, w, window_strides=(1,), padding=((1, 1),),
            dimension_numbers=("NCH", "OIH", "NCH"))
        return y + b[None, :, None]

    z = _gelu(conv1d(x, tp["conv0.w"], tp["conv0.b"]))
    z = _gelu(conv1d(z, tp["conv1.w"], tp["conv1.b"]))
    z = _gelu(conv1d(z, tp["conv2.w"], tp["conv2.b"]))
    hvec = jnp.mean(z, axis=-1)                                  # (B, H)

    t = tau.reshape(-1, 1).astype(jnp.float32)
    t1 = _gelu(t @ tp["tau1.w"].T + tp["tau1.b"])
    t2 = _gelu(t1 @ tp["tau2.w"].T + tp["tau2.b"])
    zc = jnp.concatenate([hvec, t2], axis=-1)
    h1 = _gelu(zc @ tp["pred1.w"].T + tp["pred1.b"])
    h2 = _gelu(h1 @ tp["pred2.w"].T + tp["pred2.b"])
    out = h2 @ tp["pred3.w"].T + tp["pred3.b"]
    return out.reshape(-1, step_out, out_channels)


# ----------------------------------------------------------------------------
if __name__ == "__main__":
    B, S, Cin = 4, 32, 1          # hist length == S -> resample is identity
    key = jax.random.PRNGKey(0)
    k_hist, k_tau, k_par = jax.random.split(key, 3)

    hist = jax.random.normal(k_hist, (B, S, Cin), jnp.float32)
    tau = jax.random.uniform(k_tau, (B,), jnp.float32, 0.1, 1.0)

    tparams = init_torch_params(k_par)
    y_ref = _reference_forward(hist, tau, tparams, S=S, step_out=32, out_channels=1)

    # --- f32 matmul path: tight check against the JAX reference --------------
    packed_f32 = prepare_kernel_params(tparams, B=B, S=S, matmul_dtype=jnp.float32)
    y32 = jax.block_until_ready(method_of_steps_forward(hist, tau, packed_f32))
    assert y32.shape == (B, 32, 1), y32.shape
    assert bool(jnp.all(jnp.isfinite(y32)))
    err32 = float(jnp.max(jnp.abs(y32 - y_ref)))
    assert err32 < 2e-4, err32

    # --- bf16 matmul-operand path (MXU-native on v6e/v7x): relaxed tolerance -
    packed_bf16 = prepare_kernel_params(tparams, B=B, S=S, matmul_dtype=jnp.bfloat16)
    y16 = jax.block_until_ready(method_of_steps_forward(hist, tau, packed_bf16))
    assert y16.shape == (B, 32, 1), y16.shape
    assert bool(jnp.all(jnp.isfinite(y16)))
    err16 = float(jnp.max(jnp.abs(y16 - y_ref)))
    assert err16 < 1e-1, err16

    print("KERNEL_OK")
</pallas_src>

<mosaic_0001>
module attributes {stable_mosaic.version = 11 : i64} {
  func.func @kernel(%arg0: memref<16x128xf32, #tpu.memory_space<vmem>>, %arg1: memref<720x128xf32, #tpu.memory_space<vmem>>, %arg2: memref<528x128xf32, #tpu.memory_space<vmem>>, %arg3: memref<4x32xf32, #tpu.memory_space<vmem>>) attributes {dimension_semantics = [], scalar_prefetch = 0 : i64, scratch_operands = 0 : i64, tpu.core_type = #tpu.core_type<tc>} {
    %c0 = arith.constant 0 : index
    %c0_0 = arith.constant 0 : index
    %0 = vector.load %arg2[%c0, %c0_0] : memref<528x128xf32, #tpu.memory_space<vmem>>, vector<1x128xf32>
    %c8 = arith.constant 8 : index
    %c0_1 = arith.constant 0 : index
    %1 = vector.load %arg2[%c8, %c0_1] : memref<528x128xf32, #tpu.memory_space<vmem>>, vector<1x128xf32>
    %c0_2 = arith.constant 0 : index
    %c0_3 = arith.constant 0 : index
    %2 = vector.load %arg0[%c0_2, %c0_3] : memref<16x128xf32, #tpu.memory_space<vmem>>, vector<2x128xf32>
    %c0_4 = arith.constant 0 : index
    %c0_5 = arith.constant 0 : index
    %3 = vector.load %arg1[%c0_4, %c0_5] : memref<720x128xf32, #tpu.memory_space<vmem>>, vector<192x2xf32>
    %4 = vector.extract_strided_slice %3 {offsets = [0, 0], sizes = [192, 1], strides = [1, 1]} : vector<192x2xf32> to vector<192x1xf32>
    %5 = vector.extract_strided_slice %2 {offsets = [0, 0], sizes = [1, 128], strides = [1, 1]} : vector<2x128xf32> to vector<1x128xf32>
    %6 = vector.broadcast %4 : vector<192x1xf32> to vector<192x128xf32>
    %7 = vector.broadcast %5 : vector<1x128xf32> to vector<192x128xf32>
    %8 = arith.mulf %6, %7 : vector<192x128xf32>
    %9 = vector.extract_strided_slice %3 {offsets = [0, 1], sizes = [192, 1], strides = [1, 1]} : vector<192x2xf32> to vector<192x1xf32>
    %10 = vector.extract_strided_slice %2 {offsets = [1, 0], sizes = [1, 128], strides = [1, 1]} : vector<2x128xf32> to vector<1x128xf32>
    %11 = vector.broadcast %9 : vector<192x1xf32> to vector<192x128xf32>
    %12 = vector.broadcast %10 : vector<1x128xf32> to vector<192x128xf32>
    %13 = arith.mulf %11, %12 : vector<192x128xf32>
    %14 = arith.addf %8, %13 : vector<192x128xf32>
    %15 = vector.extract_strided_slice %14 {offsets = [64, 0], sizes = [64, 128], strides = [1, 1]} : vector<192x128xf32> to vector<64x128xf32>
    %16 = vector.extract_strided_slice %14 {offsets = [0, 0], sizes = [64, 128], strides = [1, 1]} : vector<192x128xf32> to vector<64x128xf32>
    %c1_i32 = arith.constant 1 : i32
    %17 = tpu.dynamic_rotate %16 by %c1_i32 dim 1 : vector<64x128xf32>, i32 -> vector<64x128xf32>
    %18 = vector.broadcast %0 : vector<1x128xf32> to vector<64x128xf32>
    %19 = arith.mulf %18, %17 : vector<64x128xf32>
    %20 = arith.addf %15, %19 : vector<64x128xf32>
    %21 = vector.extract_strided_slice %14 {offsets = [128, 0], sizes = [64, 128], strides = [1, 1]} : vector<192x128xf32> to vector<64x128xf32>
    %c127_i32 = arith.constant 127 : i32
    %22 = tpu.dynamic_rotate %21 by %c127_i32 dim 1 : vector<64x128xf32>, i32 -> vector<64x128xf32>
    %23 = vector.broadcast %1 : vector<1x128xf32> to vector<64x128xf32>
    %24 = arith.mulf %23, %22 : vector<64x128xf32>
    %25 = arith.addf %20, %24 : vector<64x128xf32>
    %cst = arith.constant 5.000000e-01 : f32
    %26 = vector.broadcast %cst : f32 to vector<64x128xf32>
    %27 = arith.mulf %26, %25 : vector<64x128xf32>
    %28 = arith.mulf %25, %25 : vector<64x128xf32>
    %29 = arith.mulf %28, %25 : vector<64x128xf32>
    %cst_6 = arith.constant 4.471500e-02 : f32
    %30 = vector.broadcast %cst_6 : f32 to vector<64x128xf32>
    %31 = arith.mulf %30, %29 : vector<64x128xf32>
    %32 = arith.addf %25, %31 : vector<64x128xf32>
    %cst_7 = arith.constant 0.797884583 : f32
    %33 = vector.broadcast %cst_7 : f32 to vector<64x128xf32>
    %34 = arith.mulf %33, %32 : vector<64x128xf32>
    %35 = math.tanh %34 : vector<64x128xf32>
    %cst_8 = arith.constant 1.000000e+00 : f32
    %36 = vector.broadcast %cst_8 : f32 to vector<64x128xf32>
    %37 = arith.addf %36, %35 : vector<64x128xf32>
    %38 = arith.mulf %27, %37 : vector<64x128xf32>
    %c192 = arith.constant 192 : index
    %c0_9 = arith.constant 0 : index
    %39 = vector.load %arg1[%c192, %c0_9] : memref<720x128xf32, #tpu.memory_space<vmem>>, vector<192x64xf32>
    %c144 = arith.constant 144 : index
    %c0_10 = arith.constant 0 : index
    %40 = vector.load %arg2[%c144, %c0_10] : memref<528x128xf32, #tpu.memory_space<vmem>>, vector<64x1xf32>
    %cst_11 = arith.constant dense<0.000000e+00> : vector<192x128xf32>
    %41 = tpu.matmul %39, %38, %cst_11 {dimension_numbers = #tpu.dot_dimension_numbers<[1], [0], [0], [1], [0, 0, 1, 1], [], []>} : vector<192x64xf32>, vector<64x128xf32>, vector<192x128xf32> -> vector<192x128xf32>
    %42 = vector.extract_strided_slice %41 {offsets = [64, 0], sizes = [64, 128], strides = [1, 1]} : vector<192x128xf32> to vector<64x128xf32>
    %43 = vector.broadcast %40 : vector<64x1xf32> to vector<64x128xf32>
    %44 = arith.addf %42, %43 : vector<64x128xf32>
    %45 = vector.extract_strided_slice %41 {offsets = [0, 0], sizes = [64, 128], strides = [1, 1]} : vector<192x128xf32> to vector<64x128xf32>
    %c1_i32_12 = arith.constant 1 : i32
    %46 = tpu.dynamic_rotate %45 by %c1_i32_12 dim 1 : vector<64x128xf32>, i32 -> vector<64x128xf32>
    %47 = vector.broadcast %0 : vector<1x128xf32> to vector<64x128xf32>
    %48 = arith.mulf %47, %46 : vector<64x128xf32>
    %49 = arith.addf %44, %48 : vector<64x128xf32>
    %50 = vector.extract_strided_slice %41 {offsets = [128, 0], sizes = [64, 128], strides = [1, 1]} : vector<192x128xf32> to vector<64x128xf32>
    %c127_i32_13 = arith.constant 127 : i32
    %51 = tpu.dynamic_rotate %50 by %c127_i32_13 dim 1 : vector<64x128xf32>, i32 -> vector<64x128xf32>
    %52 = vector.broadcast %1 : vector<1x128xf32> to vector<64x128xf32>
    %53 = arith.mulf %52, %51 : vector<64x128xf32>
    %54 = arith.addf %49, %53 : vector<64x128xf32>
    %cst_14 = arith.constant 5.000000e-01 : f32
    %55 = vector.broadcast %cst_14 : f32 to vector<64x128xf32>
    %56 = arith.mulf %55, %54 : vector<64x128xf32>
    %57 = arith.mulf %54, %54 : vector<64x128xf32>
    %58 = arith.mulf %57, %54 : vector<64x128xf32>
    %cst_15 = arith.constant 4.471500e-02 : f32
    %59 = vector.broadcast %cst_15 : f32 to vector<64x128xf32>
    %60 = arith.mulf %59, %58 : vector<64x128xf32>
    %61 = arith.addf %54, %60 : vector<64x128xf32>
    %cst_16 = arith.constant 0.797884583 : f32
    %62 = vector.broadcast %cst_16 : f32 to vector<64x128xf32>
    %63 = arith.mulf %62, %61 : vector<64x128xf32>
    %64 = math.tanh %63 : vector<64x128xf32>
    %cst_17 = arith.constant 1.000000e+00 : f32
    %65 = vector.broadcast %cst_17 : f32 to vector<64x128xf32>
    %66 = arith.addf %65, %64 : vector<64x128xf32>
    %67 = arith.mulf %56, %66 : vector<64x128xf32>
    %c384 = arith.constant 384 : index
    %c0_18 = arith.constant 0 : index
    %68 = vector.load %arg1[%c384, %c0_18] : memref<720x128xf32, #tpu.memory_space<vmem>>, vector<192x64xf32>
    %c208 = arith.constant 208 : index
    %c0_19 = arith.constant 0 : index
    %69 = vector.load %arg2[%c208, %c0_19] : memref<528x128xf32, #tpu.memory_space<vmem>>, vector<64x1xf32>
    %cst_20 = arith.constant dense<0.000000e+00> : vector<192x128xf32>
    %70 = tpu.matmul %68, %67, %cst_20 {dimension_numbers = #tpu.dot_dimension_numbers<[1], [0], [0], [1], [0, 0, 1, 1], [], []>} : vector<192x64xf32>, vector<64x128xf32>, vector<192x128xf32> -> vector<192x128xf32>
    %71 = vector.extract_strided_slice %70 {offsets = [64, 0], sizes = [64, 128], strides = [1, 1]} : vector<192x128xf32> to vector<64x128xf32>
    %72 = vector.broadcast %69 : vector<64x1xf32> to vector<64x128xf32>
    %73 = arith.addf %71, %72 : vector<64x128xf32>
    %74 = vector.extract_strided_slice %70 {offsets = [0, 0], sizes = [64, 128], strides = [1, 1]} : vector<192x128xf32> to vector<64x128xf32>
    %c1_i32_21 = arith.constant 1 : i32
    %75 = tpu.dynamic_rotate %74 by %c1_i32_21 dim 1 : vector<64x128xf32>, i32 -> vector<64x128xf32>
    %76 = vector.broadcast %0 : vector<1x128xf32> to vector<64x128xf32>
    %77 = arith.mulf %76, %75 : vector<64x128xf32>
    %78 = arith.addf %73, %77 : vector<64x128xf32>
    %79 = vector.extract_strided_slice %70 {offsets = [128, 0], sizes = [64, 128], strides = [1, 1]} : vector<192x128xf32> to vector<64x128xf32>
    %c127_i32_22 = arith.constant 127 : i32
    %80 = tpu.dynamic_rotate %79 by %c127_i32_22 dim 1 : vector<64x128xf32>, i32 -> vector<64x128xf32>
    %81 = vector.broadcast %1 : vector<1x128xf32> to vector<64x128xf32>
    %82 = arith.mulf %81, %80 : vector<64x128xf32>
    %83 = arith.addf %78, %82 : vector<64x128xf32>
    %cst_23 = arith.constant 5.000000e-01 : f32
    %84 = vector.broadcast %cst_23 : f32 to vector<64x128xf32>
    %85 = arith.mulf %84, %83 : vector<64x128xf32>
    %86 = arith.mulf %83, %83 : vector<64x128xf32>
    %87 = arith.mulf %86, %83 : vector<64x128xf32>
    %cst_24 = arith.constant 4.471500e-02 : f32
    %88 = vector.broadcast %cst_24 : f32 to vector<64x128xf32>
    %89 = arith.mulf %88, %87 : vector<64x128xf32>
    %90 = arith.addf %83, %89 : vector<64x128xf32>
    %cst_25 = arith.constant 0.797884583 : f32
    %91 = vector.broadcast %cst_25 : f32 to vector<64x128xf32>
    %92 = arith.mulf %91, %90 : vector<64x128xf32>
    %93 = math.tanh %92 : vector<64x128xf32>
    %cst_26 = arith.constant 1.000000e+00 : f32
    %94 = vector.broadcast %cst_26 : f32 to vector<64x128xf32>
    %95 = arith.addf %94, %93 : vector<64x128xf32>
    %96 = arith.mulf %85, %95 : vector<64x128xf32>
    %c16 = arith.constant 16 : index
    %c0_27 = arith.constant 0 : index
    %97 = vector.load %arg2[%c16, %c0_27] : memref<528x128xf32, #tpu.memory_space<vmem>>, vector<128x4xf32>
    %cst_28 = arith.constant dense<0.000000e+00> : vector<64x4xf32>
    %98 = tpu.matmul %96, %97, %cst_28 {dimension_numbers = #tpu.dot_dimension_numbers<[1], [0], [0], [1], [0, 0, 1, 1], [], []>} : vector<64x128xf32>, vector<128x4xf32>, vector<64x4xf32> -> vector<64x4xf32>
    %c8_29 = arith.constant 8 : index
    %c0_30 = arith.constant 0 : index
    %99 = vector.load %arg0[%c8_29, %c0_30] : memref<16x128xf32, #tpu.memory_space<vmem>>, vector<4x1xf32>
    %c272 = arith.constant 272 : index
    %c0_31 = arith.constant 0 : index
    %100 = vector.load %arg2[%c272, %c0_31] : memref<528x128xf32, #tpu.memory_space<vmem>>, vector<1x16xf32>
    %101 = vector.broadcast %99 : vector<4x1xf32> to vector<4x16xf32>
    %102 = vector.broadcast %100 : vector<1x16xf32> to vector<4x16xf32>
    %103 = arith.mulf %101, %102 : vector<4x16xf32>
    %c280 = arith.constant 280 : index
    %c0_32 = arith.constant 0 : index
    %104 = vector.load %arg2[%c280, %c0_32] : memref<528x128xf32, #tpu.memory_space<vmem>>, vector<1x16xf32>
    %105 = vector.broadcast %104 : vector<1x16xf32> to vector<4x16xf32>
    %106 = arith.addf %103, %105 : vector<4x16xf32>
    %cst_33 = arith.constant 5.000000e-01 : f32
    %107 = vector.broadcast %cst_33 : f32 to vector<4x16xf32>
    %108 = arith.mulf %107, %106 : vector<4x16xf32>
    %109 = arith.mulf %106, %106 : vector<4x16xf32>
    %110 = arith.mulf %109, %106 : vector<4x16xf32>
    %cst_34 = arith.constant 4.471500e-02 : f32
    %111 = vector.broadcast %cst_34 : f32 to vector<4x16xf32>
    %112 = arith.mulf %111, %110 : vector<4x16xf32>
    %113 = arith.addf %106, %112 : vector<4x16xf32>
    %cst_35 = arith.constant 0.797884583 : f32
    %114 = vector.broadcast %cst_35 : f32 to vector<4x16xf32>
    %115 = arith.mulf %114, %113 : vector<4x16xf32>
    %116 = math.tanh %115 : vector<4x16xf32>
    %cst_36 = arith.constant 1.000000e+00 : f32
    %117 = vector.broadcast %cst_36 : f32 to vector<4x16xf32>
    %118 = arith.addf %117, %116 : vector<4x16xf32>
    %119 = arith.mulf %108, %118 : vector<4x16xf32>
    %c288 = arith.constant 288 : index
    %c0_37 = arith.constant 0 : index
    %120 = vector.load %arg2[%c288, %c0_37] : memref<528x128xf32, #tpu.memory_space<vmem>>, vector<16x16xf32>
    %cst_38 = arith.constant dense<0.000000e+00> : vector<4x16xf32>
    %121 = tpu.matmul %119, %120, %cst_38 {dimension_numbers = #tpu.dot_dimension_numbers<[1], [0], [0], [1], [0, 0, 1, 1], [], []>} : vector<4x16xf32>, vector<16x16xf32>, vector<4x16xf32> -> vector<4x16xf32>
    %c304 = arith.constant 304 : index
    %c0_39 = arith.constant 0 : index
    %122 = vector.load %arg2[%c304, %c0_39] : memref<528x128xf32, #tpu.memory_space<vmem>>, vector<1x16xf32>
    %123 = vector.broadcast %122 : vector<1x16xf32> to vector<4x16xf32>
    %124 = arith.addf %121, %123 : vector<4x16xf32>
    %cst_40 = arith.constant 5.000000e-01 : f32
    %125 = vector.broadcast %cst_40 : f32 to vector<4x16xf32>
    %126 = arith.mulf %125, %124 : vector<4x16xf32>
    %127 = arith.mulf %124, %124 : vector<4x16xf32>
    %128 = arith.mulf %127, %124 : vector<4x16xf32>
    %cst_41 = arith.constant 4.471500e-02 : f32
    %129 = vector.broadcast %cst_41 : f32 to vector<4x16xf32>
    %130 = arith.mulf %129, %128 : vector<4x16xf32>
    %131 = arith.addf %124, %130 : vector<4x16xf32>
    %cst_42 = arith.constant 0.797884583 : f32
    %132 = vector.broadcast %cst_42 : f32 to vector<4x16xf32>
    %133 = arith.mulf %132, %131 : vector<4x16xf32>
    %134 = math.tanh %133 : vector<4x16xf32>
    %cst_43 = arith.constant 1.000000e+00 : f32
    %135 = vector.broadcast %cst_43 : f32 to vector<4x16xf32>
    %136 = arith.addf %135, %134 : vector<4x16xf32>
    %137 = arith.mulf %126, %136 : vector<4x16xf32>
    %c576 = arith.constant 576 : index
    %c0_44 = arith.constant 0 : index
    %138 = vector.load %arg1[%c576, %c0_44] : memref<720x128xf32, #tpu.memory_space<vmem>>, vector<16x128xf32>
    %c592 = arith.constant 592 : index
    %c0_45 = arith.constant 0 : index
    %139 = vector.load %arg1[%c592, %c0_45] : memref<720x128xf32, #tpu.memory_space<vmem>>, vector<128x128xf32>
    %c312 = arith.constant 312 : index
    %c0_46 = arith.constant 0 : index
    %140 = vector.load %arg2[%c312, %c0_46] : memref<528x128xf32, #tpu.memory_space<vmem>>, vector<64x128xf32>
    %cst_47 = arith.constant dense<0.000000e+00> : vector<4x128xf32>
    %141 = tpu.matmul %98, %140, %cst_47 {dimension_numbers = #tpu.dot_dimension_numbers<[0], [0], [1], [1], [0, 1, 1, 1], [], []>} : vector<64x4xf32>, vector<64x128xf32>, vector<4x128xf32> -> vector<4x128xf32>
    %cst_48 = arith.constant dense<0.000000e+00> : vector<4x128xf32>
    %142 = tpu.matmul %137, %138, %cst_48 {dimension_numbers = #tpu.dot_dimension_numbers<[1], [0], [0], [1], [0, 0, 1, 1], [], []>} : vector<4x16xf32>, vector<16x128xf32>, vector<4x128xf32> -> vector<4x128xf32>
    %143 = arith.addf %141, %142 : vector<4x128xf32>
    %c376 = arith.constant 376 : index
    %c0_49 = arith.constant 0 : index
    %144 = vector.load %arg2[%c376, %c0_49] : memref<528x128xf32, #tpu.memory_space<vmem>>, vector<1x128xf32>
    %145 = vector.broadcast %144 : vector<1x128xf32> to vector<4x128xf32>
    %146 = arith.addf %143, %145 : vector<4x128xf32>
    %cst_50 = arith.constant 5.000000e-01 : f32
    %147 = vector.broadcast %cst_50 : f32 to vector<4x128xf32>
    %148 = arith.mulf %147, %146 : vector<4x128xf32>
    %149 = arith.mulf %146, %146 : vector<4x128xf32>
    %150 = arith.mulf %149, %146 : vector<4x128xf32>
    %cst_51 = arith.constant 4.471500e-02 : f32
    %151 = vector.broadcast %cst_51 : f32 to vector<4x128xf32>
    %152 = arith.mulf %151, %150 : vector<4x128xf32>
    %153 = arith.addf %146, %152 : vector<4x128xf32>
    %cst_52 = arith.constant 0.797884583 : f32
    %154 = vector.broadcast %cst_52 : f32 to vector<4x128xf32>
    %155 = arith.mulf %154, %153 : vector<4x128xf32>
    %156 = math.tanh %155 : vector<4x128xf32>
    %cst_53 = arith.constant 1.000000e+00 : f32
    %157 = vector.broadcast %cst_53 : f32 to vector<4x128xf32>
    %158 = arith.addf %157, %156 : vector<4x128xf32>
    %159 = arith.mulf %148, %158 : vector<4x128xf32>
    %cst_54 = arith.constant dense<0.000000e+00> : vector<4x128xf32>
    %160 = tpu.matmul %159, %139, %cst_54 {dimension_numbers = #tpu.dot_dimension_numbers<[1], [0], [0], [1], [0, 0, 1, 1], [], []>} : vector<4x128xf32>, vector<128x128xf32>, vector<4x128xf32> -> vector<4x128xf32>
    %c384_55 = arith.constant 384 : index
    %c0_56 = arith.constant 0 : index
    %161 = vector.load %arg2[%c384_55, %c0_56] : memref<528x128xf32, #tpu.memory_space<vmem>>, vector<1x128xf32>
    %162 = vector.broadcast %161 : vector<1x128xf32> to vector<4x128xf32>
    %163 = arith.addf %160, %162 : vector<4x128xf32>
    %cst_57 = arith.constant 5.000000e-01 : f32
    %164 = vector.broadcast %cst_57 : f32 to vector<4x128xf32>
    %165 = arith.mulf %164, %163 : vector<4x128xf32>
    %166 = arith.mulf %163, %163 : vector<4x128xf32>
    %167 = arith.mulf %166, %163 : vector<4x128xf32>
    %cst_58 = arith.constant 4.471500e-02 : f32
    %168 = vector.broadcast %cst_58 : f32 to vector<4x128xf32>
    %169 = arith.mulf %168, %167 : vector<4x128xf32>
    %170 = arith.addf %163, %169 : vector<4x128xf32>
    %cst_59 = arith.constant 0.797884583 : f32
    %171 = vector.broadcast %cst_59 : f32 to vector<4x128xf32>
    %172 = arith.mulf %171, %170 : vector<4x128xf32>
    %173 = math.tanh %172 : vector<4x128xf32>
    %cst_60 = arith.constant 1.000000e+00 : f32
    %174 = vector.broadcast %cst_60 : f32 to vector<4x128xf32>
    %175 = arith.addf %174, %173 : vector<4x128xf32>
    %176 = arith.mulf %165, %175 : vector<4x128xf32>
    %c392 = arith.constant 392 : index
    %c0_61 = arith.constant 0 : index
    %177 = vector.load %arg2[%c392, %c0_61] : memref<528x128xf32, #tpu.memory_space<vmem>>, vector<128x32xf32>
    %cst_62 = arith.constant dense<0.000000e+00> : vector<4x32xf32>
    %178 = tpu.matmul %176, %177, %cst_62 {dimension_numbers = #tpu.dot_dimension_numbers<[1], [0], [0], [1], [0, 0, 1, 1], [], []>} : vector<4x128xf32>, vector<128x32xf32>, vector<4x32xf32> -> vector<4x32xf32>
    %c520 = arith.constant 520 : index
    %c0_63 = arith.constant 0 : index
    %179 = vector.load %arg2[%c520, %c0_63] : memref<528x128xf32, #tpu.memory_space<vmem>>, vector<1x32xf32>
    %180 = vector.broadcast %179 : vector<1x32xf32> to vector<4x32xf32>
    %181 = arith.addf %178, %180 : vector<4x32xf32>
    %c0_64 = arith.constant 0 : index
    %c0_65 = arith.constant 0 : index
    %182 = vector.load %arg3[%c0_64, %c0_65] : memref<4x32xf32, #tpu.memory_space<vmem>>, vector<4x32xf32>
    tpu.vector_store %arg3[%c0_64, %c0_65], %181 {strides = array<i32>} : memref<4x32xf32, #tpu.memory_space<vmem>>, vector<4x32xf32>,
    return
  }
}

</mosaic_0001>

<llo_original>
// kernel: tpu_custom_call.1
$region0: #{tpu_custom_call.1}
  #allocation0 [shape = 'u32[]', space=smem, size = 0x4, offset = 0x4, fixed_abs, tag = 'smem constant byte address 0x4 - core index']
  #allocation1 [shape = 'u32[144,128]{1,0:T(1,128)}', space=vmem, size = 0x12000, scoped, tag = 'internal scratch']
  %s0 = inlined_call_operand.hbm [shape: f32[16,128], index: 0, kind: input, shape index: {}]
  %s1 = inlined_call_operand.hbm [shape: f32[720,128], index: 1, kind: input, shape index: {}]
  %s2 = inlined_call_operand.hbm [shape: f32[528,128], index: 2, kind: input, shape index: {}]
  %s3 = inlined_call_operand.hbm [shape: f32[4,32], index: 3, kind: output, shape index: {}]
  %s4 = sld [smem:[#allocation0]]
  $region34: #{tpu_custom_call.1} parent=0
    _
  %s6 = ssub.s32 1, %s4
  %s7 = scalar_select 0, %s6, %s4
  $region1: #{tpu_custom_call.1} parent=0
    #allocation2 [shape = 'u8[8192]{0}', space=vmem, size = 0x2000, scoped, tag = 'input window, operand 0, single buffered']
    #allocation3 [shape = 's32[1]{0}', space=sflag, size = 0x4, scoped, tag = 'scoped memory for tpu_custom_call.1']
    #allocation4 [shape = 's32[1]{0}', space=sflag, size = 0x4, scoped, tag = 'scoped memory for tpu_custom_call.1']
    #allocation5 [shape = 'u8[368640]{0}', space=vmem, size = 0x5a000, scoped, tag = 'input window, operand 1, single buffered']
    #allocation6 [shape = 's32[1]{0}', space=sflag, size = 0x4, scoped, tag = 'scoped memory for tpu_custom_call.1']
    #allocation7 [shape = 'u8[270336]{0}', space=vmem, size = 0x42000, scoped, tag = 'input window, operand 2, single buffered']
    #allocation8 [shape = 'u8[2048]{0}', space=vmem, size = 0x800, scoped, tag = 'output window, operand 0, single buffered']
    %8 = vsyncpa [#allocation3], 0
    %9 = vsyncpa [#allocation6], 0
    %10 = vsyncpa [#allocation4], 0
    // Predicated region
    $region2: #{tpu_custom_call.1} parent=1 // pred_check
      _
    $region3: #{tpu_custom_call.1} parent=1 // pred_check_branch
      %12 = sbr.rel (0) target = $region5
    $region4: #{tpu_custom_call.1} parent=1 // pred_region
      %s14 = ssub.s32 256, 256
      %15 = vsyncadd [#allocation3], %s14
      %s16 = sshll.u32 [#allocation2], 4
      %s17 = int_to_ptr.vmem [resolvable:$true] %s16
      %22 = dma.hbm_to_vmem [thread:$0]  %s0, 256, %s17, [#allocation3], 128, 128, 8
    $region5: #{tpu_custom_call.1} parent=1 // pred_fallthru
      _
    // Predicated region
    $region6: #{tpu_custom_call.1} parent=1 // pred_check
      _
    $region7: #{tpu_custom_call.1} parent=1 // pred_check_branch
      %24 = sbr.rel (0) target = $region9
    $region8: #{tpu_custom_call.1} parent=1 // pred_region
      %s26 = ssub.s32 11520, 11520
      %27 = vsyncadd [#allocation6], %s26
      %s28 = sshll.u32 [#allocation5], 4
      %s29 = int_to_ptr.vmem [resolvable:$true] %s28
      %34 = dma.hbm_to_vmem [thread:$0]  %s1, 11520, %s29, [#allocation6], 128, 128, 8
    $region9: #{tpu_custom_call.1} parent=1 // pred_fallthru
      _
    // Predicated region
    $region10: #{tpu_custom_call.1} parent=1 // pred_check
      _
    $region11: #{tpu_custom_call.1} parent=1 // pred_check_branch
      %36 = sbr.rel (0) target = $region13
    $region12: #{tpu_custom_call.1} parent=1 // pred_region
      %s38 = ssub.s32 8448, 8448
      %39 = vsyncadd [#allocation6], %s38
      %s40 = sshll.u32 [#allocation7], 4
      %s41 = int_to_ptr.vmem [resolvable:$true] %s40
      %46 = dma.hbm_to_vmem [thread:$0]  %s2, 8448, %s41, [#allocation6], 128, 128, 8
    $region13: #{tpu_custom_call.1} parent=1 // pred_fallthru
      _
    // Predicated region
    $region14: #{tpu_custom_call.1} parent=1 // pred_check
      _
    $region15: #{tpu_custom_call.1} parent=1 // pred_check_branch
      %48 = sbr.rel (0) target = $region17
    $region16: #{tpu_custom_call.1} parent=1 // pred_region
      %49 = dma.done [#allocation3], 256
    $region17: #{tpu_custom_call.1} parent=1 // pred_fallthru
      _
    // Predicated region
    $region18: #{tpu_custom_call.1} parent=1 // pred_check
      _
    $region19: #{tpu_custom_call.1} parent=1 // pred_check_branch
      %51 = sbr.rel (0) target = $region21
    $region20: #{tpu_custom_call.1} parent=1 // pred_region
      %52 = dma.done [#allocation6], 11520
    $region21: #{tpu_custom_call.1} parent=1 // pred_fallthru
      _
    // Predicated region
    $region22: #{tpu_custom_call.1} parent=1 // pred_check
      _
    $region23: #{tpu_custom_call.1} parent=1 // pred_check_branch
      %54 = sbr.rel (0) target = $region25
    $region24: #{tpu_custom_call.1} parent=1 // pred_region
      %55 = dma.done [#allocation6], 8448
    $region25: #{tpu_custom_call.1} parent=1 // pred_fallthru
      _
    %v56 = vld [vmem:[#allocation7] sm:$0x1]
    %v57 = vld [vmem:[#allocation7 + $0x8] sm:$0x1]
    %v58 = vld [vmem:[#allocation2] sm:$0x3]
    %v59 = vld [vmem:[#allocation5] sm:$0xff]
    %v60 = vld [vmem:[#allocation5 + $0x8] sm:$0xff]
    %v61 = vld [vmem:[#allocation5 + $0x10] sm:$0xff]
    %v62 = vld [vmem:[#allocation5 + $0x18] sm:$0xff]
    %v63 = vld [vmem:[#allocation5 + $0x20] sm:$0xff]
    %v64 = vld [vmem:[#allocation5 + $0x28] sm:$0xff]
    %v65 = vld [vmem:[#allocation5 + $0x30] sm:$0xff]
    %v66 = vld [vmem:[#allocation5 + $0x38] sm:$0xff]
    %v67 = vld [vmem:[#allocation5 + $0x40] sm:$0xff]
    %v68 = vld [vmem:[#allocation5 + $0x48] sm:$0xff]
    %v69 = vld [vmem:[#allocation5 + $0x50] sm:$0xff]
    %v70 = vld [vmem:[#allocation5 + $0x58] sm:$0xff]
    %v71 = vld [vmem:[#allocation5 + $0x60] sm:$0xff]
    %v72 = vld [vmem:[#allocation5 + $0x68] sm:$0xff]
    %v73 = vld [vmem:[#allocation5 + $0x70] sm:$0xff]
    %v74 = vld [vmem:[#allocation5 + $0x78] sm:$0xff]
    %v75 = vld [vmem:[#allocation5 + $0x80] sm:$0xff]
    %v76 = vld [vmem:[#allocation5 + $0x88] sm:$0xff]
    %v77 = vld [vmem:[#allocation5 + $0x90] sm:$0xff]
    %v78 = vld [vmem:[#allocation5 + $0x98] sm:$0xff]
    %v79 = vld [vmem:[#allocation5 + $0xa0] sm:$0xff]
    %v80 = vld [vmem:[#allocation5 + $0xa8] sm:$0xff]
    %v81 = vld [vmem:[#allocation5 + $0xb0] sm:$0xff]
    %v82 = vld [vmem:[#allocation5 + $0xb8] sm:$0xff]
    %84 = vset.pattern.permute.xlu0 0
    %85 = vperm.xlu0 %84, %v59
    %v86 = vpop.permute.xlu0 %85
    %89 = vset.pattern.permute.xlu0 0
    %90 = vperm.xlu0 %89, %v60
    %v91 = vpop.permute.xlu0 %90
    %94 = vset.pattern.permute.xlu0 0
    %95 = vperm.xlu0 %94, %v61
    %v96 = vpop.permute.xlu0 %95
    %99 = vset.pattern.permute.xlu0 0
    %100 = vperm.xlu0 %99, %v62
    %v101 = vpop.permute.xlu0 %100
    %104 = vset.pattern.permute.xlu0 0
    %105 = vperm.xlu0 %104, %v63
    %v106 = vpop.permute.xlu0 %105
    %109 = vset.pattern.permute.xlu0 0
    %110 = vperm.xlu0 %109, %v64
    %v111 = vpop.permute.xlu0 %110
    %114 = vset.pattern.permute.xlu0 0
    %115 = vperm.xlu0 %114, %v65
    %v116 = vpop.permute.xlu0 %115
    %119 = vset.pattern.permute.xlu0 0
    %120 = vperm.xlu0 %119, %v66
    %v121 = vpop.permute.xlu0 %120
    %124 = vset.pattern.permute.xlu0 0
    %125 = vperm.xlu0 %124, %v67
    %v126 = vpop.permute.xlu0 %125
    %129 = vset.pattern.permute.xlu0 0
    %130 = vperm.xlu0 %129, %v68
    %v131 = vpop.permute.xlu0 %130
    %134 = vset.pattern.permute.xlu0 0
    %135 = vperm.xlu0 %134, %v69
    %v136 = vpop.permute.xlu0 %135
    %139 = vset.pattern.permute.xlu0 0
    %140 = vperm.xlu0 %139, %v70
    %v141 = vpop.permute.xlu0 %140
    %144 = vset.pattern.permute.xlu0 0
    %145 = vperm.xlu0 %144, %v71
    %v146 = vpop.permute.xlu0 %145
    %149 = vset.pattern.permute.xlu0 0
    %150 = vperm.xlu0 %149, %v72
    %v151 = vpop.permute.xlu0 %150
    %154 = vset.pattern.permute.xlu0 0
    %155 = vperm.xlu0 %154, %v73
    %v156 = vpop.permute.xlu0 %155
    %159 = vset.pattern.permute.xlu0 0
    %160 = vperm.xlu0 %159, %v74
    %v161 = vpop.permute.xlu0 %160
    %164 = vset.pattern.permute.xlu0 0
    %165 = vperm.xlu0 %164, %v75
    %v166 = vpop.permute.xlu0 %165
    %169 = vset.pattern.permute.xlu0 0
    %170 = vperm.xlu0 %169, %v76
    %v171 = vpop.permute.xlu0 %170
    %174 = vset.pattern.permute.xlu0 0
    %175 = vperm.xlu0 %174, %v77
    %v176 = vpop.permute.xlu0 %175
    %179 = vset.pattern.permute.xlu0 0
    %180 = vperm.xlu0 %179, %v78
    %v181 = vpop.permute.xlu0 %180
    %184 = vset.pattern.permute.xlu0 0
    %185 = vperm.xlu0 %184, %v79
    %v186 = vpop.permute.xlu0 %185
    %189 = vset.pattern.permute.xlu0 0
    %190 = vperm.xlu0 %189, %v80
    %v191 = vpop.permute.xlu0 %190
    %194 = vset.pattern.permute.xlu0 0
    %195 = vperm.xlu0 %194, %v81
    %v196 = vpop.permute.xlu0 %195
    %199 = vset.pattern.permute.xlu0 0
    %200 = vperm.xlu0 %199, %v82
    %v201 = vpop.permute.xlu0 %200
    %v203 = vlaneseq
    %v204 = vshrl.u32 %v203, 7
    %v205 = vsub.s32 0, %v204
    %v206 = vrot.slane %v58, %v205
    %v207 = vmul.f32 %v86, %v206
    %v208 = vmul.f32 %v91, %v206
    %v209 = vmul.f32 %v96, %v206
    %v210 = vmul.f32 %v101, %v206
    %v211 = vmul.f32 %v106, %v206
    %v212 = vmul.f32 %v111, %v206
    %v213 = vmul.f32 %v116, %v206
    %v214 = vmul.f32 %v121, %v206
    %v215 = vmul.f32 %v126, %v206
    %v216 = vmul.f32 %v131, %v206
    %v217 = vmul.f32 %v136, %v206
    %v218 = vmul.f32 %v141, %v206
    %v219 = vmul.f32 %v146, %v206
    %v220 = vmul.f32 %v151, %v206
    %v221 = vmul.f32 %v156, %v206
    %v222 = vmul.f32 %v161, %v206
    %v223 = vmul.f32 %v166, %v206
    %v224 = vmul.f32 %v171, %v206
    %v225 = vmul.f32 %v176, %v206
    %v226 = vmul.f32 %v181, %v206
    %v227 = vmul.f32 %v186, %v206
    %v228 = vmul.f32 %v191, %v206
    %v229 = vmul.f32 %v196, %v206
    %v230 = vmul.f32 %v201, %v206
    %231 = vset.pattern.permute.xlu0 1
    %232 = vperm.xlu0 %231, %v59
    %v233 = vpop.permute.xlu0 %232
    %235 = vset.pattern.permute.xlu0 1
    %236 = vperm.xlu0 %235, %v60
    %v237 = vpop.permute.xlu0 %236
    %239 = vset.pattern.permute.xlu0 1
    %240 = vperm.xlu0 %239, %v61
    %v241 = vpop.permute.xlu0 %240
    %243 = vset.pattern.permute.xlu0 1
    %244 = vperm.xlu0 %243, %v62
    %v245 = vpop.permute.xlu0 %244
    %247 = vset.pattern.permute.xlu0 1
    %248 = vperm.xlu0 %247, %v63
    %v249 = vpop.permute.xlu0 %248
    %251 = vset.pattern.permute.xlu0 1
    %252 = vperm.xlu0 %251, %v64
    %v253 = vpop.permute.xlu0 %252
    %255 = vset.pattern.permute.xlu0 1
    %256 = vperm.xlu0 %255, %v65
    %v257 = vpop.permute.xlu0 %256
    %259 = vset.pattern.permute.xlu0 1
    %260 = vperm.xlu0 %259, %v66
    %v261 = vpop.permute.xlu0 %260
    %263 = vset.pattern.permute.xlu0 1
    %264 = vperm.xlu0 %263, %v67
    %v265 = vpop.permute.xlu0 %264
    %267 = vset.pattern.permute.xlu0 1
    %268 = vperm.xlu0 %267, %v68
    %v269 = vpop.permute.xlu0 %268
    %271 = vset.pattern.permute.xlu0 1
    %272 = vperm.xlu0 %271, %v69
    %v273 = vpop.permute.xlu0 %272
    %275 = vset.pattern.permute.xlu0 1
    %276 = vperm.xlu0 %275, %v70
    %v277 = vpop.permute.xlu0 %276
    %279 = vset.pattern.permute.xlu0 1
    %280 = vperm.xlu0 %279, %v71
    %v281 = vpop.permute.xlu0 %280
    %283 = vset.pattern.permute.xlu0 1
    %284 = vperm.xlu0 %283, %v72
    %v285 = vpop.permute.xlu0 %284
    %287 = vset.pattern.permute.xlu0 1
    %288 = vperm.xlu0 %287, %v73
    %v289 = vpop.permute.xlu0 %288
    %291 = vset.pattern.permute.xlu0 1
    %292 = vperm.xlu0 %291, %v74
    %v293 = vpop.permute.xlu0 %292
    %295 = vset.pattern.permute.xlu0 1
    %296 = vperm.xlu0 %295, %v75
    %v297 = vpop.permute.xlu0 %296
    %299 = vset.pattern.permute.xlu0 1
    %300 = vperm.xlu0 %299, %v76
    %v301 = vpop.permute.xlu0 %300
    %303 = vset.pattern.permute.xlu0 1
    %304 = vperm.xlu0 %303, %v77
    %v305 = vpop.permute.xlu0 %304
    %307 = vset.pattern.permute.xlu0 1
    %308 = vperm.xlu0 %307, %v78
    %v309 = vpop.permute.xlu0 %308
    %311 = vset.pattern.permute.xlu0 1
    %312 = vperm.xlu0 %311, %v79
    %v313 = vpop.permute.xlu0 %312
    %315 = vset.pattern.permute.xlu0 1
    %316 = vperm.xlu0 %315, %v80
    %v317 = vpop.permute.xlu0 %316
    %319 = vset.pattern.permute.xlu0 1
    %320 = vperm.xlu0 %319, %v81
    %v321 = vpop.permute.xlu0 %320
    %323 = vset.pattern.permute.xlu0 1
    %324 = vperm.xlu0 %323, %v82
    %v325 = vpop.permute.xlu0 %324
    %v327 = vlaneseq
    %v328 = vshrl.u32 %v327, 7
    %v329 = vsub.s32 1, %v328
    %v330 = vrot.slane %v58, %v329
    %v331 = vmul.f32 %v233, %v330
    %v332 = vmul.f32 %v237, %v330
    %v333 = vmul.f32 %v241, %v330
    %v334 = vmul.f32 %v245, %v330
    %v335 = vmul.f32 %v249, %v330
    %v336 = vmul.f32 %v253, %v330
    %v337 = vmul.f32 %v257, %v330
    %v338 = vmul.f32 %v261, %v330
    %v339 = vmul.f32 %v265, %v330
    %v340 = vmul.f32 %v269, %v330
    %v341 = vmul.f32 %v273, %v330
    %v342 = vmul.f32 %v277, %v330
    %v343 = vmul.f32 %v281, %v330
    %v344 = vmul.f32 %v285, %v330
    %v345 = vmul.f32 %v289, %v330
    %v346 = vmul.f32 %v293, %v330
    %v347 = vmul.f32 %v297, %v330
    %v348 = vmul.f32 %v301, %v330
    %v349 = vmul.f32 %v305, %v330
    %v350 = vmul.f32 %v309, %v330
    %v351 = vmul.f32 %v313, %v330
    %v352 = vmul.f32 %v317, %v330
    %v353 = vmul.f32 %v321, %v330
    %v354 = vmul.f32 %v325, %v330
    %v355 = vadd.f32 %v207, %v331
    %v356 = vadd.f32 %v208, %v332
    %v357 = vadd.f32 %v209, %v333
    %v358 = vadd.f32 %v210, %v334
    %v359 = vadd.f32 %v211, %v335
    %v360 = vadd.f32 %v212, %v336
    %v361 = vadd.f32 %v213, %v337
    %v362 = vadd.f32 %v214, %v338
    %v363 = vadd.f32 %v215, %v339
    %v364 = vadd.f32 %v216, %v340
    %v365 = vadd.f32 %v217, %v341
    %v366 = vadd.f32 %v218, %v342
    %v367 = vadd.f32 %v219, %v343
    %v368 = vadd.f32 %v220, %v344
    %v369 = vadd.f32 %v221, %v345
    %v370 = vadd.f32 %v222, %v346
    %v371 = vadd.f32 %v223, %v347
    %v372 = vadd.f32 %v224, %v348
    %v373 = vadd.f32 %v225, %v349
    %v374 = vadd.f32 %v226, %v350
    %v375 = vadd.f32 %v227, %v351
    %v376 = vadd.f32 %v228, %v352
    %v377 = vadd.f32 %v229, %v353
    %v378 = vadd.f32 %v230, %v354
    %379 = vrot.lane.b32.xlu0 %v355, 1
    %v380 = vpop.permute.xlu0 %379
    %381 = vrot.lane.b32.xlu0 %v356, 1
    %v382 = vpop.permute.xlu0 %381
    %383 = vrot.lane.b32.xlu0 %v357, 1
    %v384 = vpop.permute.xlu0 %383
    %385 = vrot.lane.b32.xlu0 %v358, 1
    %v386 = vpop.permute.xlu0 %385
    %387 = vrot.lane.b32.xlu0 %v359, 1
    %v388 = vpop.permute.xlu0 %387
    %389 = vrot.lane.b32.xlu0 %v360, 1
    %v390 = vpop.permute.xlu0 %389
    %391 = vrot.lane.b32.xlu0 %v361, 1
    %v392 = vpop.permute.xlu0 %391
    %393 = vrot.lane.b32.xlu0 %v362, 1
    %v394 = vpop.permute.xlu0 %393
    %v395 = vlaneseq
    %v396 = vshrl.u32 %v395, 7
    %v397 = vsub.s32 0, %v396
    %v398 = vrot.slane %v56, %v397
    %v399 = vmul.f32 %v398, %v380
    %v400 = vmul.f32 %v398, %v382
    %v401 = vmul.f32 %v398, %v384
    %v402 = vmul.f32 %v398, %v386
    %v403 = vmul.f32 %v398, %v388
    %v404 = vmul.f32 %v398, %v390
    %v405 = vmul.f32 %v398, %v392
    %v406 = vmul.f32 %v398, %v394
    %v407 = vadd.f32 %v363, %v399
    %v408 = vadd.f32 %v364, %v400
    %v409 = vadd.f32 %v365, %v401
    %v410 = vadd.f32 %v366, %v402
    %v411 = vadd.f32 %v367, %v403
    %v412 = vadd.f32 %v368, %v404
    %v413 = vadd.f32 %v369, %v405
    %v414 = vadd.f32 %v370, %v406
    %415 = vrot.lane.b32.xlu0 %v371, 127
    %v416 = vpop.permute.xlu0 %415
    %417 = vrot.lane.b32.xlu0 %v372, 127
    %v418 = vpop.permute.xlu0 %417
    %419 = vrot.lane.b32.xlu0 %v373, 127
    %v420 = vpop.permute.xlu0 %419
    %421 = vrot.lane.b32.xlu0 %v374, 127
    %v422 = vpop.permute.xlu0 %421
    %423 = vrot.lane.b32.xlu0 %v375, 127
    %v424 = vpop.permute.xlu0 %423
    %425 = vrot.lane.b32.xlu0 %v376, 127
    %v426 = vpop.permute.xlu0 %425
    %427 = vrot.lane.b32.xlu0 %v377, 127
    %v428 = vpop.permute.xlu0 %427
    %429 = vrot.lane.b32.xlu0 %v378, 127
    %v430 = vpop.permute.xlu0 %429
    %v431 = vlaneseq
    %v432 = vshrl.u32 %v431, 7
    %v433 = vsub.s32 0, %v432
    %v434 = vrot.slane %v57, %v433
    %v435 = vmul.f32 %v434, %v416
    %v436 = vmul.f32 %v434, %v418
    %v437 = vmul.f32 %v434, %v420
    %v438 = vmul.f32 %v434, %v422
    %v439 = vmul.f32 %v434, %v424
    %v440 = vmul.f32 %v434, %v426
    %v441 = vmul.f32 %v434, %v428
    %v442 = vmul.f32 %v434, %v430
    %v443 = vadd.f32 %v407, %v435
    %v444 = vadd.f32 %v408, %v436
    %v445 = vadd.f32 %v409, %v437
    %v446 = vadd.f32 %v410, %v438
    %v447 = vadd.f32 %v411, %v439
    %v448 = vadd.f32 %v412, %v440
    %v449 = vadd.f32 %v413, %v441
    %v450 = vadd.f32 %v414, %v442
    %v451 = vmul.f32 %v443, 0.5
    %v452 = vmul.f32 %v444, 0.5
    %v453 = vmul.f32 %v445, 0.5
    %v454 = vmul.f32 %v446, 0.5
    %v455 = vmul.f32 %v447, 0.5
    %v456 = vmul.f32 %v448, 0.5
    %v457 = vmul.f32 %v449, 0.5
    %v458 = vmul.f32 %v450, 0.5
    %v459 = vmul.f32 %v443, %v443
    %v460 = vmul.f32 %v444, %v444
    %v461 = vmul.f32 %v445, %v445
    %v462 = vmul.f32 %v446, %v446
    %v463 = vmul.f32 %v447, %v447
    %v464 = vmul.f32 %v448, %v448
    %v465 = vmul.f32 %v449, %v449
    %v466 = vmul.f32 %v450, %v450
    %v467 = vmul.f32 %v459, %v443
    %v468 = vmul.f32 %v460, %v444
    %v469 = vmul.f32 %v461, %v445
    %v470 = vmul.f32 %v462, %v446
    %v471 = vmul.f32 %v463, %v447
    %v472 = vmul.f32 %v464, %v448
    %v473 = vmul.f32 %v465, %v449
    %v474 = vmul.f32 %v466, %v450
    %v475 = vmul.f32 %v467, 0.044715
    %v476 = vmul.f32 %v468, 0.044715
    %v477 = vmul.f32 %v469, 0.044715
    %v478 = vmul.f32 %v470, 0.044715
    %v479 = vmul.f32 %v471, 0.044715
    %v480 = vmul.f32 %v472, 0.044715
    %v481 = vmul.f32 %v473, 0.044715
    %v482 = vmul.f32 %v474, 0.044715
    %v483 = vadd.f32 %v443, %v475
    %v484 = vadd.f32 %v444, %v476
    %v485 = vadd.f32 %v445, %v477
    %v486 = vadd.f32 %v446, %v478
    %v487 = vadd.f32 %v447, %v479
    %v488 = vadd.f32 %v448, %v480
    %v489 = vadd.f32 %v449, %v481
    %v490 = vadd.f32 %v450, %v482
    %v491 = vmul.f32 %v483, 0.7978846
    %v492 = vmul.f32 %v484, 0.7978846
    %v493 = vmul.f32 %v485, 0.7978846
    %v494 = vmul.f32 %v486, 0.7978846
    %v495 = vmul.f32 %v487, 0.7978846
    %v496 = vmul.f32 %v488, 0.7978846
    %v497 = vmul.f32 %v489, 0.7978846
    %v498 = vmul.f32 %v490, 0.7978846
    %v499 = vtanh.pop %v491
    %v500 = vtanh.pop %v492
    %v501 = vtanh.pop %v493
    %v502 = vtanh.pop %v494
    %v503 = vtanh.pop %v495
    %v504 = vtanh.pop %v496
    %v505 = vtanh.pop %v497
    %v506 = vtanh.pop %v498
    %v507 = vadd.f32 %v499, 1.0
    %v508 = vadd.f32 %v500, 1.0
    %v509 = vadd.f32 %v501, 1.0
    %v510 = vadd.f32 %v502, 1.0
    %v511 = vadd.f32 %v503, 1.0
    %v512 = vadd.f32 %v504, 1.0
    %v513 = vadd.f32 %v505, 1.0
    %v514 = vadd.f32 %v506, 1.0
    %v515 = vmul.f32 %v451, %v507
    %v516 = vmul.f32 %v452, %v508
    %v517 = vmul.f32 %v453, %v509
    %v518 = vmul.f32 %v454, %v510
    %v519 = vmul.f32 %v455, %v511
    %v520 = vmul.f32 %v456, %v512
    %v521 = vmul.f32 %v457, %v513
    %v522 = vmul.f32 %v458, %v514
    %v523 = vld [vmem:[#allocation5 + $0xc0] sm:$0xff]
    %v524 = vld [vmem:[#allocation5 + $0xc8] sm:$0xff]
    %v525 = vld [vmem:[#allocation5 + $0xd0] sm:$0xff]
    %v526 = vld [vmem:[#allocation5 + $0xd8] sm:$0xff]
    %v527 = vld [vmem:[#allocation5 + $0xe0] sm:$0xff]
    %v528 = vld [vmem:[#allocation5 + $0xe8] sm:$0xff]
    %v529 = vld [vmem:[#allocation5 + $0xf0] sm:$0xff]
    %v530 = vld [vmem:[#allocation5 + $0xf8] sm:$0xff]
    %v531 = vld [vmem:[#allocation5 + $0x100] sm:$0xff]
    %v532 = vld [vmem:[#allocation5 + $0x108] sm:$0xff]
    %v533 = vld [vmem:[#allocation5 + $0x110] sm:$0xff]
    %v534 = vld [vmem:[#allocation5 + $0x118] sm:$0xff]
    %v535 = vld [vmem:[#allocation5 + $0x120] sm:$0xff]
    %v536 = vld [vmem:[#allocation5 + $0x128] sm:$0xff]
    %v537 = vld [vmem:[#allocation5 + $0x130] sm:$0xff]
    %v538 = vld [vmem:[#allocation5 + $0x138] sm:$0xff]
    %v539 = vld [vmem:[#allocation5 + $0x140] sm:$0xff]
    %v540 = vld [vmem:[#allocation5 + $0x148] sm:$0xff]
    %v541 = vld [vmem:[#allocation5 + $0x150] sm:$0xff]
    %v542 = vld [vmem:[#allocation5 + $0x158] sm:$0xff]
    %v543 = vld [vmem:[#allocation5 + $0x160] sm:$0xff]
    %v544 = vld [vmem:[#allocation5 + $0x168] sm:$0xff]
    %v545 = vld [vmem:[#allocation5 + $0x170] sm:$0xff]
    %v546 = vld [vmem:[#allocation5 + $0x178] sm:$0xff]
    %v547 = vld [vmem:[#allocation7 + $0x90] sm:$0xff]
    %v548 = vld [vmem:[#allocation7 + $0x98] sm:$0xff]
    %v549 = vld [vmem:[#allocation7 + $0xa0] sm:$0xff]
    %v550 = vld [vmem:[#allocation7 + $0xa8] sm:$0xff]
    %v551 = vld [vmem:[#allocation7 + $0xb0] sm:$0xff]
    %v552 = vld [vmem:[#allocation7 + $0xb8] sm:$0xff]
    %v553 = vld [vmem:[#allocation7 + $0xc0] sm:$0xff]
    %v554 = vld [vmem:[#allocation7 + $0xc8] sm:$0xff]
    %vm555 = vcmask 523264
    %v557 = vsel %vm555, %v523, 0
    %v560 = vsel %vm555, %v524, 0
    %v563 = vsel %vm555, %v525, 0
    %v566 = vsel %vm555, %v526, 0
    %v569 = vsel %vm555, %v527, 0
    %v572 = vsel %vm555, %v528, 0
    %v575 = vsel %vm555, %v529, 0
    %v578 = vsel %vm555, %v530, 0
    %v581 = vsel %vm555, %v531, 0
    %v584 = vsel %vm555, %v532, 0
    %v587 = vsel %vm555, %v533, 0
    %v590 = vsel %vm555, %v534, 0
    %v593 = vsel %vm555, %v535, 0
    %v596 = vsel %vm555, %v536, 0
    %v599 = vsel %vm555, %v537, 0
    %v602 = vsel %vm555, %v538, 0
    %v605 = vsel %vm555, %v539, 0
    %v608 = vsel %vm555, %v540, 0
    %v611 = vsel %vm555, %v541, 0
    %v614 = vsel %vm555, %v542, 0
    %v617 = vsel %vm555, %v543, 0
    %v620 = vsel %vm555, %v544, 0
    %v623 = vsel %vm555, %v545, 0
    %v626 = vsel %vm555, %v546, 0
    %628 = vmatprep.subr.mxu0 0.0
    %629 = vmatpush1.msra.mxu0 %v515
    %630 = vmatprep.subr.mxu0 0.0
    %631 = vmatpush1.msra.mxu0 %v516
    %632 = vmatprep.subr.mxu0 0.0
    %633 = vmatpush1.msra.mxu0 %v517
    %634 = vmatprep.subr.mxu0 0.0
    %635 = vmatpush1.msra.mxu0 %v518
    %636 = vmatprep.subr.mxu0 0.0
    %637 = vmatpush1.msra.mxu0 %v519
    %638 = vmatprep.subr.mxu0 0.0
    %639 = vmatpush1.msra.mxu0 %v520
    %640 = vmatprep.subr.mxu0 0.0
    %641 = vmatpush1.msra.mxu0 %v521
    %642 = vmatprep.subr.mxu0 0.0
    %643 = vmatpush1.msra.mxu0 %v522
    %644 = vmatprep.subr.mxu0 0.0
    %645 = vmatpush1.msra.mxu0 0.0
    %646 = vmatprep.subr.mxu0 0.0
    %647 = vmatpush1.msra.mxu0 0.0
    %648 = vmatprep.subr.mxu0 0.0
    %649 = vmatpush1.msra.mxu0 0.0
    %650 = vmatprep.subr.mxu0 0.0
    %651 = vmatpush1.msra.mxu0 0.0
    %652 = vmatprep.subr.mxu0 0.0
    %653 = vmatpush1.msra.mxu0 0.0
    %654 = vmatprep.subr.mxu0 0.0
    %655 = vmatpush1.msra.mxu0 0.0
    %656 = vmatprep.subr.mxu0 0.0
    %657 = vmatpush1.msra.mxu0 0.0
    %658 = vmatprep.subr.mxu0 0.0
    %659 = vmatpush1.msra.mxu0 0.0
    %660 = vmatprep.subr.mxu0 0.0
    %661 = vmatpush1.msra.mxu0 0.0
    %662 = vmatprep.subr.mxu0 0.0
    %663 = vmatpush1.msra.mxu0 0.0
    %664 = vmatprep.subr.mxu0 0.0
    %665 = vmatpush1.msra.mxu0 0.0
    %666 = vmatprep.subr.mxu0 0.0
    %667 = vmatpush1.msra.mxu0 0.0
    %668 = vmatprep.subr.mxu0 0.0
    %669 = vmatpush1.msra.mxu0 0.0
    %670 = vmatprep.subr.mxu0 0.0
    %671 = vmatpush1.msra.mxu0 0.0
    %672 = vmatprep.subr.mxu0 0.0
    %673 = vmatpush1.msra.mxu0 0.0
    %674 = vmatprep.subr.mxu0 0.0
    %675 = vmatpush1.msra.mxu0 0.0
    %676 = vmatprep.subr.mxu0 0.0
    %677 = vmatpush1.msra.mxu0 0.0
    %678 = vmatprep.subr.mxu0 0.0
    %679 = vmatpush1.msra.mxu0 0.0
    %680 = vmatprep.subr.mxu0 0.0
    %681 = vmatpush1.msra.mxu0 0.0
    %682 = vmatprep.subr.mxu0 0.0
    %683 = vmatpush1.msra.mxu0 0.0
    %684 = vmatprep.subr.mxu0 0.0
    %685 = vmatpush1.msra.mxu0 0.0
    %686 = vmatprep.subr.mxu0 0.0
    %687 = vmatpush1.msra.mxu0 0.0
    %688 = vmatprep.subr.mxu0 0.0
    %689 = vmatpush1.msra.mxu0 0.0
    %690 = vmatprep.subr.mxu0 0.0
    %691 = vmatpush1.msra.mxu0 0.0
    %692 = vmatprep.mubr.f32.mxu0 0.0
    %693 = vmatmul.mubr.f32.gmra.mrb[0].mxu0 %v557
    %v694 = vpop.f32.mrb[0].mxu0
    %v695 = vadd.f32 0.0, %v694
    %v696 = vpop.f32.mrb[0].mxu0
    %697 = vmatprep.mubr.f32.mxu0 0.0
    %698 = vmatmul.mubr.f32.gmra.mrb[0].mxu0 %v560
    %v699 = vpop.f32.mrb[0].mxu0
    %v700 = vadd.f32 0.0, %v699
    %v701 = vpop.f32.mrb[0].mxu0
    %702 = vmatprep.mubr.f32.mxu0 0.0
    %703 = vmatmul.mubr.f32.gmra.mrb[0].mxu0 %v563
    %v704 = vpop.f32.mrb[0].mxu0
    %v705 = vadd.f32 0.0, %v704
    %v706 = vpop.f32.mrb[0].mxu0
    %707 = vmatprep.mubr.f32.mxu0 0.0
    %708 = vmatmul.mubr.f32.gmra.mrb[0].mxu0 %v566
    %v709 = vpop.f32.mrb[0].mxu0
    %v710 = vadd.f32 0.0, %v709
    %v711 = vpop.f32.mrb[0].mxu0
    %712 = vmatprep.mubr.f32.mxu0 0.0
    %713 = vmatmul.mubr.f32.gmra.mrb[0].mxu0 %v569
    %v714 = vpop.f32.mrb[0].mxu0
    %v715 = vadd.f32 0.0, %v714
    %v716 = vpop.f32.mrb[0].mxu0
    %717 = vmatprep.mubr.f32.mxu0 0.0
    %718 = vmatmul.mubr.f32.gmra.mrb[0].mxu0 %v572
    %v719 = vpop.f32.mrb[0].mxu0
    %v720 = vadd.f32 0.0, %v719
    %v721 = vpop.f32.mrb[0].mxu0
    %722 = vmatprep.mubr.f32.mxu0 0.0
    %723 = vmatmul.mubr.f32.gmra.mrb[0].mxu0 %v575
    %v724 = vpop.f32.mrb[0].mxu0
    %v725 = vadd.f32 0.0, %v724
    %v726 = vpop.f32.mrb[0].mxu0
    %727 = vmatprep.mubr.f32.mxu0 0.0
    %728 = vmatmul.mubr.f32.gmra.mrb[0].mxu0 %v578
    %v729 = vpop.f32.mrb[0].mxu0
    %v730 = vadd.f32 0.0, %v729
    %v731 = vpop.f32.mrb[0].mxu0
    %732 = vmatprep.mubr.f32.mxu0 0.0
    %733 = vmatmul.mubr.f32.gmra.mrb[0].mxu0 %v581
    %v734 = vpop.f32.mrb[0].mxu0
    %v735 = vadd.f32 0.0, %v734
    %v736 = vpop.f32.mrb[0].mxu0
    %737 = vmatprep.mubr.f32.mxu0 0.0
    %738 = vmatmul.mubr.f32.gmra.mrb[0].mxu0 %v584
    %v739 = vpop.f32.mrb[0].mxu0
    %v740 = vadd.f32 0.0, %v739
    %v741 = vpop.f32.mrb[0].mxu0
    %742 = vmatprep.mubr.f32.mxu0 0.0
    %743 = vmatmul.mubr.f32.gmra.mrb[0].mxu0 %v587
    %v744 = vpop.f32.mrb[0].mxu0
    %v745 = vadd.f32 0.0, %v744
    %v746 = vpop.f32.mrb[0].mxu0
    %747 = vmatprep.mubr.f32.mxu0 0.0
    %748 = vmatmul.mubr.f32.gmra.mrb[0].mxu0 %v590
    %v749 = vpop.f32.mrb[0].mxu0
    %v750 = vadd.f32 0.0, %v749
    %v751 = vpop.f32.mrb[0].mxu0
    %752 = vmatprep.mubr.f32.mxu0 0.0
    %753 = vmatmul.mubr.f32.gmra.mrb[0].mxu0 %v593
    %v754 = vpop.f32.mrb[0].mxu0
    %v755 = vadd.f32 0.0, %v754
    %v756 = vpop.f32.mrb[0].mxu0
    %757 = vmatprep.mubr.f32.mxu0 0.0
    %758 = vmatmul.mubr.f32.gmra.mrb[0].mxu0 %v596
    %v759 = vpop.f32.mrb[0].mxu0
    %v760 = vadd.f32 0.0, %v759
    %v761 = vpop.f32.mrb[0].mxu0
    %762 = vmatprep.mubr.f32.mxu0 0.0
    %763 = vmatmul.mubr.f32.gmra.mrb[0].mxu0 %v599
    %v764 = vpop.f32.mrb[0].mxu0
    %v765 = vadd.f32 0.0, %v764
    %v766 = vpop.f32.mrb[0].mxu0
    %767 = vmatprep.mubr.f32.mxu0 0.0
    %768 = vmatmul.mubr.f32.gmra.mrb[0].mxu0 %v602
    %v769 = vpop.f32.mrb[0].mxu0
    %v770 = vadd.f32 0.0, %v769
    %v771 = vpop.f32.mrb[0].mxu0
    %772 = vmatprep.mubr.f32.mxu0 0.0
    %773 = vmatmul.mubr.f32.gmra.mrb[0].mxu0 %v605
    %v774 = vpop.f32.mrb[0].mxu0
    %v775 = vadd.f32 0.0, %v774
    %v776 = vpop.f32.mrb[0].mxu0
    %777 = vmatprep.mubr.f32.mxu0 0.0
    %778 = vmatmul.mubr.f32.gmra.mrb[0].mxu0 %v608
    %v779 = vpop.f32.mrb[0].mxu0
    %v780 = vadd.f32 0.0, %v779
    %v781 = vpop.f32.mrb[0].mxu0
    %782 = vmatprep.mubr.f32.mxu0 0.0
    %783 = vmatmul.mubr.f32.gmra.mrb[0].mxu0 %v611
    %v784 = vpop.f32.mrb[0].mxu0
    %v785 = vadd.f32 0.0, %v784
    %v786 = vpop.f32.mrb[0].mxu0
    %787 = vmatprep.mubr.f32.mxu0 0.0
    %788 = vmatmul.mubr.f32.gmra.mrb[0].mxu0 %v614
    %v789 = vpop.f32.mrb[0].mxu0
    %v790 = vadd.f32 0.0, %v789
    %v791 = vpop.f32.mrb[0].mxu0
    %792 = vmatprep.mubr.f32.mxu0 0.0
    %793 = vmatmul.mubr.f32.gmra.mrb[0].mxu0 %v617
    %v794 = vpop.f32.mrb[0].mxu0
    %v795 = vadd.f32 0.0, %v794
    %v796 = vpop.f32.mrb[0].mxu0
    %797 = vmatprep.mubr.f32.mxu0 0.0
    %798 = vmatmul.mubr.f32.gmra.mrb[0].mxu0 %v620
    %v799 = vpop.f32.mrb[0].mxu0
    %v800 = vadd.f32 0.0, %v799
    %v801 = vpop.f32.mrb[0].mxu0
    %802 = vmatprep.mubr.f32.mxu0 0.0
    %803 = vmatmul.mubr.f32.gmra.mrb[0].mxu0 %v623
    %v804 = vpop.f32.mrb[0].mxu0
    %v805 = vadd.f32 0.0, %v804
    %v806 = vpop.f32.mrb[0].mxu0
    %807 = vmatprep.mubr.f32.mxu0 0.0
    %808 = vmatmul.mubr.f32.gmra.mrb[0].mxu0 %v626
    %v809 = vpop.f32.mrb[0].mxu0
    %v810 = vadd.f32 0.0, %v809
    %v811 = vpop.f32.mrb[0].mxu0
    %812 = vdwg.mxu0
    %814 = vset.pattern.permute.xlu0 0
    %815 = vperm.xlu0 %814, %v547
    %v816 = vpop.permute.xlu0 %815
    %819 = vset.pattern.permute.xlu0 0
    %820 = vperm.xlu0 %819, %v548
    %v821 = vpop.permute.xlu0 %820
    %824 = vset.pattern.permute.xlu0 0
    %825 = vperm.xlu0 %824, %v549
    %v826 = vpop.permute.xlu0 %825
    %829 = vset.pattern.permute.xlu0 0
    %830 = vperm.xlu0 %829, %v550
    %v831 = vpop.permute.xlu0 %830
    %834 = vset.pattern.permute.xlu0 0
    %835 = vperm.xlu0 %834, %v551
    %v836 = vpop.permute.xlu0 %835
    %839 = vset.pattern.permute.xlu0 0
    %840 = vperm.xlu0 %839, %v552
    %v841 = vpop.permute.xlu0 %840
    %844 = vset.pattern.permute.xlu0 0
    %845 = vperm.xlu0 %844, %v553
    %v846 = vpop.permute.xlu0 %845
    %849 = vset.pattern.permute.xlu0 0
    %850 = vperm.xlu0 %849, %v554
    %v851 = vpop.permute.xlu0 %850
    %v853 = vadd.f32 %v735, %v816
    %v854 = vadd.f32 %v740, %v821
    %v855 = vadd.f32 %v745, %v826
    %v856 = vadd.f32 %v750, %v831
    %v857 = vadd.f32 %v755, %v836
    %v858 = vadd.f32 %v760, %v841
    %v859 = vadd.f32 %v765, %v846
    %v860 = vadd.f32 %v770, %v851
    %861 = vrot.lane.b32.xlu0 %v695, 1
    %v862 = vpop.permute.xlu0 %861
    %863 = vrot.lane.b32.xlu0 %v700, 1
    %v864 = vpop.permute.xlu0 %863
    %865 = vrot.lane.b32.xlu0 %v705, 1
    %v866 = vpop.permute.xlu0 %865
    %867 = vrot.lane.b32.xlu0 %v710, 1
    %v868 = vpop.permute.xlu0 %867
    %869 = vrot.lane.b32.xlu0 %v715, 1
    %v870 = vpop.permute.xlu0 %869
    %871 = vrot.lane.b32.xlu0 %v720, 1
    %v872 = vpop.permute.xlu0 %871
    %873 = vrot.lane.b32.xlu0 %v725, 1
    %v874 = vpop.permute.xlu0 %873
    %875 = vrot.lane.b32.xlu0 %v730, 1
    %v876 = vpop.permute.xlu0 %875
    %v877 = vmul.f32 %v398, %v862
    %v878 = vmul.f32 %v398, %v864
    %v879 = vmul.f32 %v398, %v866
    %v880 = vmul.f32 %v398, %v868
    %v881 = vmul.f32 %v398, %v870
    %v882 = vmul.f32 %v398, %v872
    %v883 = vmul.f32 %v398, %v874
    %v884 = vmul.f32 %v398, %v876
    %v885 = vadd.f32 %v853, %v877
    %v886 = vadd.f32 %v854, %v878
    %v887 = vadd.f32 %v855, %v879
    %v888 = vadd.f32 %v856, %v880
    %v889 = vadd.f32 %v857, %v881
    %v890 = vadd.f32 %v858, %v882
    %v891 = vadd.f32 %v859, %v883
    %v892 = vadd.f32 %v860, %v884
    %893 = vrot.lane.b32.xlu0 %v775, 127
    %v894 = vpop.permute.xlu0 %893
    %895 = vrot.lane.b32.xlu0 %v780, 127
    %v896 = vpop.permute.xlu0 %895
    %897 = vrot.lane.b32.xlu0 %v785, 127
    %v898 = vpop.permute.xlu0 %897
    %899 = vrot.lane.b32.xlu0 %v790, 127
    %v900 = vpop.permute.xlu0 %899
    %901 = vrot.lane.b32.xlu0 %v795, 127
    %v902 = vpop.permute.xlu0 %901
    %903 = vrot.lane.b32.xlu0 %v800, 127
    %v904 = vpop.permute.xlu0 %903
    %905 = vrot.lane.b32.xlu0 %v805, 127
    %v906 = vpop.permute.xlu0 %905
    %907 = vrot.lane.b32.xlu0 %v810, 127
    %v908 = vpop.permute.xlu0 %907
    %v909 = vmul.f32 %v434, %v894
    %v910 = vmul.f32 %v434, %v896
    %v911 = vmul.f32 %v434, %v898
    %v912 = vmul.f32 %v434, %v900
    %v913 = vmul.f32 %v434, %v902
    %v914 = vmul.f32 %v434, %v904
    %v915 = vmul.f32 %v434, %v906
    %v916 = vmul.f32 %v434, %v908
    %v917 = vadd.f32 %v885, %v909
    %v918 = vadd.f32 %v886, %v910
    %v919 = vadd.f32 %v887, %v911
    %v920 = vadd.f32 %v888, %v912
    %v921 = vadd.f32 %v889, %v913
    %v922 = vadd.f32 %v890, %v914
    %v923 = vadd.f32 %v891, %v915
    %v924 = vadd.f32 %v892, %v916
    %v925 = vmul.f32 %v917, 0.5
    %v926 = vmul.f32 %v918, 0.5
    %v927 = vmul.f32 %v919, 0.5
    %v928 = vmul.f32 %v920, 0.5
    %v929 = vmul.f32 %v921, 0.5
    %v930 = vmul.f32 %v922, 0.5
    %v931 = vmul.f32 %v923, 0.5
    %v932 = vmul.f32 %v924, 0.5
    %v933 = vmul.f32 %v917, %v917
    %v934 = vmul.f32 %v918, %v918
    %v935 = vmul.f32 %v919, %v919
    %v936 = vmul.f32 %v920, %v920
    %v937 = vmul.f32 %v921, %v921
    %v938 = vmul.f32 %v922, %v922
    %v939 = vmul.f32 %v923, %v923
    %v940 = vmul.f32 %v924, %v924
    %v941 = vmul.f32 %v933, %v917
    %v942 = vmul.f32 %v934, %v918
    %v943 = vmul.f32 %v935, %v919
    %v944 = vmul.f32 %v936, %v920
    %v945 = vmul.f32 %v937, %v921
    %v946 = vmul.f32 %v938, %v922
    %v947 = vmul.f32 %v939, %v923
    %v948 = vmul.f32 %v940, %v924
    %v949 = vmul.f32 %v941, 0.044715
    %v950 = vmul.f32 %v942, 0.044715
    %v951 = vmul.f32 %v943, 0.044715
    %v952 = vmul.f32 %v944, 0.044715
    %v953 = vmul.f32 %v945, 0.044715
    %v954 = vmul.f32 %v946, 0.044715
    %v955 = vmul.f32 %v947, 0.044715
    %v956 = vmul.f32 %v948, 0.044715
    %v957 = vadd.f32 %v917, %v949
    %v958 = vadd.f32 %v918, %v950
    %v959 = vadd.f32 %v919, %v951
    %v960 = vadd.f32 %v920, %v952
    %v961 = vadd.f32 %v921, %v953
    %v962 = vadd.f32 %v922, %v954
    %v963 = vadd.f32 %v923, %v955
    %v964 = vadd.f32 %v924, %v956
    %v965 = vmul.f32 %v957, 0.7978846
    %v966 = vmul.f32 %v958, 0.7978846
    %v967 = vmul.f32 %v959, 0.7978846
    %v968 = vmul.f32 %v960, 0.7978846
    %v969 = vmul.f32 %v961, 0.7978846
    %v970 = vmul.f32 %v962, 0.7978846
    %v971 = vmul.f32 %v963, 0.7978846
    %v972 = vmul.f32 %v964, 0.7978846
    %v973 = vtanh.pop %v965
    %v974 = vtanh.pop %v966
    %v975 = vtanh.pop %v967
    %v976 = vtanh.pop %v968
    %v977 = vtanh.pop %v969
    %v978 = vtanh.pop %v970
    %v979 = vtanh.pop %v971
    %v980 = vtanh.pop %v972
    %v981 = vadd.f32 %v973, 1.0
    %v982 = vadd.f32 %v974, 1.0
    %v983 = vadd.f32 %v975, 1.0
    %v984 = vadd.f32 %v976, 1.0
    %v985 = vadd.f32 %v977, 1.0
    %v986 = vadd.f32 %v978, 1.0
    %v987 = vadd.f32 %v979, 1.0
    %v988 = vadd.f32 %v980, 1.0
    %v989 = vmul.f32 %v925, %v981
    %v990 = vmul.f32 %v926, %v982
    %v991 = vmul.f32 %v927, %v983
    %v992 = vmul.f32 %v928, %v984
    %v993 = vmul.f32 %v929, %v985
    %v994 = vmul.f32 %v930, %v986
    %v995 = vmul.f32 %v931, %v987
    %v996 = vmul.f32 %v932, %v988
    %v997 = vld [vmem:[#allocation5 + $0x180] sm:$0xff]
    %v998 = vld [vmem:[#allocation5 + $0x188] sm:$0xff]
    %v999 = vld [vmem:[#allocation5 + $0x190] sm:$0xff]
    %v1000 = vld [vmem:[#allocation5 + $0x198] sm:$0xff]
    %v1001 = vld [vmem:[#allocation5 + $0x1a0] sm:$0xff]
    %v1002 = vld [vmem:[#allocation5 + $0x1a8] sm:$0xff]
    %v1003 = vld [vmem:[#allocation5 + $0x1b0] sm:$0xff]
    %v1004 = vld [vmem:[#allocation5 + $0x1b8] sm:$0xff]
    %v1005 = vld [vmem:[#allocation5 + $0x1c0] sm:$0xff]
    %v1006 = vld [vmem:[#allocation5 + $0x1c8] sm:$0xff]
    %v1007 = vld [vmem:[#allocation5 + $0x1d0] sm:$0xff]
    %v1008 = vld [vmem:[#allocation5 + $0x1d8] sm:$0xff]
    %v1009 = vld [vmem:[#allocation5 + $0x1e0] sm:$0xff]
    %v1010 = vld [vmem:[#allocation5 + $0x1e8] sm:$0xff]
    %v1011 = vld [vmem:[#allocation5 + $0x1f0] sm:$0xff]
    %v1012 = vld [vmem:[#allocation5 + $0x1f8] sm:$0xff]
    %v1013 = vld [vmem:[#allocation5 + $0x200] sm:$0xff]
    %v1014 = vld [vmem:[#allocation5 + $0x208] sm:$0xff]
    %v1015 = vld [vmem:[#allocation5 + $0x210] sm:$0xff]
    %v1016 = vld [vmem:[#allocation5 + $0x218] sm:$0xff]
    %v1017 = vld [vmem:[#allocation5 + $0x220] sm:$0xff]
    %v1018 = vld [vmem:[#allocation5 + $0x228] sm:$0xff]
    %v1019 = vld [vmem:[#allocation5 + $0x230] sm:$0xff]
    %v1020 = vld [vmem:[#allocation5 + $0x238] sm:$0xff]
    %v1021 = vld [vmem:[#allocation7 + $0xd0] sm:$0xff]
    %v1022 = vld [vmem:[#allocation7 + $0xd8] sm:$0xff]
    %v1023 = vld [vmem:[#allocation7 + $0xe0] sm:$0xff]
    %v1024 = vld [vmem:[#allocation7 + $0xe8] sm:$0xff]
    %v1025 = vld [vmem:[#allocation7 + $0xf0] sm:$0xff]
    %v1026 = vld [vmem:[#allocation7 + $0xf8] sm:$0xff]
    %v1027 = vld [vmem:[#allocation7 + $0x100] sm:$0xff]
    %v1028 = vld [vmem:[#allocation7 + $0x108] sm:$0xff]
    %v1030 = vsel %vm555, %v997, 0
    %v1033 = vsel %vm555, %v998, 0
    %v1036 = vsel %vm555, %v999, 0
    %v1039 = vsel %vm555, %v1000, 0
    %v1042 = vsel %vm555, %v1001, 0
    %v1045 = vsel %vm555, %v1002, 0
    %v1048 = vsel %vm555, %v1003, 0
    %v1051 = vsel %vm555, %v1004, 0
    %v1054 = vsel %vm555, %v1005, 0
    %v1057 = vsel %vm555, %v1006, 0
    %v1060 = vsel %vm555, %v1007, 0
    %v1063 = vsel %vm555, %v1008, 0
    %v1066 = vsel %vm555, %v1009, 0
    %v1069 = vsel %vm555, %v1010, 0
    %v1072 = vsel %vm555, %v1011, 0
    %v1075 = vsel %vm555, %v1012, 0
    %v1078 = vsel %vm555, %v1013, 0
    %v1081 = vsel %vm555, %v1014, 0
    %v1084 = vsel %vm555, %v1015, 0
    %v1087 = vsel %vm555, %v1016, 0
    %v1090 = vsel %vm555, %v1017, 0
    %v1093 = vsel %vm555, %v1018, 0
    %v1096 = vsel %vm555, %v1019, 0
    %v1099 = vsel %vm555, %v1020, 0
    %1101 = vmatprep.subr.mxu0 0.0
    %1102 = vmatpush1.msra.mxu0 %v989
    %1103 = vmatprep.subr.mxu0 0.0
    %1104 = vmatpush1.msra.mxu0 %v990
    %1105 = vmatprep.subr.mxu0 0.0
    %1106 = vmatpush1.msra.mxu0 %v991
    %1107 = vmatprep.subr.mxu0 0.0
    %1108 = vmatpush1.msra.mxu0 %v992
    %1109 = vmatprep.subr.mxu0 0.0
    %1110 = vmatpush1.msra.mxu0 %v993
    %1111 = vmatprep.subr.mxu0 0.0
    %1112 = vmatpush1.msra.mxu0 %v994
    %1113 = vmatprep.subr.mxu0 0.0
    %1114 = vmatpush1.msra.mxu0 %v995
    %1115 = vmatprep.subr.mxu0 0.0
    %1116 = vmatpush1.msra.mxu0 %v996
    %1117 = vmatprep.subr.mxu0 0.0
    %1118 = vmatpush1.msra.mxu0 0.0
    %1119 = vmatprep.subr.mxu0 0.0
    %1120 = vmatpush1.msra.mxu0 0.0
    %1121 = vmatprep.subr.mxu0 0.0
    %1122 = vmatpush1.msra.mxu0 0.0
    %1123 = vmatprep.subr.mxu0 0.0
    %1124 = vmatpush1.msra.mxu0 0.0
    %1125 = vmatprep.subr.mxu0 0.0
    %1126 = vmatpush1.msra.mxu0 0.0
    %1127 = vmatprep.subr.mxu0 0.0
    %1128 = vmatpush1.msra.mxu0 0.0
    %1129 = vmatprep.subr.mxu0 0.0
    %1130 = vmatpush1.msra.mxu0 0.0
    %1131 = vmatprep.subr.mxu0 0.0
    %1132 = vmatpush1.msra.mxu0 0.0
    %1133 = vmatprep.subr.mxu0 0.0
    %1134 = vmatpush1.msra.mxu0 0.0
    %1135 = vmatprep.subr.mxu0 0.0
    %1136 = vmatpush1.msra.mxu0 0.0
    %1137 = vmatprep.subr.mxu0 0.0
    %1138 = vmatpush1.msra.mxu0 0.0
    %1139 = vmatprep.subr.mxu0 0.0
    %1140 = vmatpush1.msra.mxu0 0.0
    %1141 = vmatprep.subr.mxu0 0.0
    %1142 = vmatpush1.msra.mxu0 0.0
    %1143 = vmatprep.subr.mxu0 0.0
    %1144 = vmatpush1.msra.mxu0 0.0
    %1145 = vmatprep.subr.mxu0 0.0
    %1146 = vmatpush1.msra.mxu0 0.0
    %1147 = vmatprep.subr.mxu0 0.0
    %1148 = vmatpush1.msra.mxu0 0.0
    %1149 = vmatprep.subr.mxu0 0.0
    %1150 = vmatpush1.msra.mxu0 0.0
    %1151 = vmatprep.subr.mxu0 0.0
    %1152 = vmatpush1.msra.mxu0 0.0
    %1153 = vmatprep.subr.mxu0 0.0
    %1154 = vmatpush1.msra.mxu0 0.0
    %1155 = vmatprep.subr.mxu0 0.0
    %1156 = vmatpush1.msra.mxu0 0.0
    %1157 = vmatprep.subr.mxu0 0.0
    %1158 = vmatpush1.msra.mxu0 0.0
    %1159 = vmatprep.subr.mxu0 0.0
    %1160 = vmatpush1.msra.mxu0 0.0
    %1161 = vmatprep.subr.mxu0 0.0
    %1162 = vmatpush1.msra.mxu0 0.0
    %1163 = vmatprep.subr.mxu0 0.0
    %1164 = vmatpush1.msra.mxu0 0.0
    %1165 = vmatprep.mubr.f32.mxu0 0.0
    %1166 = vmatmul.mubr.f32.gmra.mrb[0].mxu0 %v1030
    %v1167 = vpop.f32.mrb[0].mxu0
    %v1168 = vadd.f32 0.0, %v1167
    %v1169 = vpop.f32.mrb[0].mxu0
    %1170 = vmatprep.mubr.f32.mxu0 0.0
    %1171 = vmatmul.mubr.f32.gmra.mrb[0].mxu0 %v1033
    %v1172 = vpop.f32.mrb[0].mxu0
    %v1173 = vadd.f32 0.0, %v1172
    %v1174 = vpop.f32.mrb[0].mxu0
    %1175 = vmatprep.mubr.f32.mxu0 0.0
    %1176 = vmatmul.mubr.f32.gmra.mrb[0].mxu0 %v1036
    %v1177 = vpop.f32.mrb[0].mxu0
    %v1178 = vadd.f32 0.0, %v1177
    %v1179 = vpop.f32.mrb[0].mxu0
    %1180 = vmatprep.mubr.f32.mxu0 0.0
    %1181 = vmatmul.mubr.f32.gmra.mrb[0].mxu0 %v1039
    %v1182 = vpop.f32.mrb[0].mxu0
    %v1183 = vadd.f32 0.0, %v1182
    %v1184 = vpop.f32.mrb[0].mxu0
    %1185 = vmatprep.mubr.f32.mxu0 0.0
    %1186 = vmatmul.mubr.f32.gmra.mrb[0].mxu0 %v1042
    %v1187 = vpop.f32.mrb[0].mxu0
    %v1188 = vadd.f32 0.0, %v1187
    %v1189 = vpop.f32.mrb[0].mxu0
    %1190 = vmatprep.mubr.f32.mxu0 0.0
    %1191 = vmatmul.mubr.f32.gmra.mrb[0].mxu0 %v1045
    %v1192 = vpop.f32.mrb[0].mxu0
    %v1193 = vadd.f32 0.0, %v1192
    %v1194 = vpop.f32.mrb[0].mxu0
    %1195 = vmatprep.mubr.f32.mxu0 0.0
    %1196 = vmatmul.mubr.f32.gmra.mrb[0].mxu0 %v1048
    %v1197 = vpop.f32.mrb[0].mxu0
    %v1198 = vadd.f32 0.0, %v1197
    %v1199 = vpop.f32.mrb[0].mxu0
    %1200 = vmatprep.mubr.f32.mxu0 0.0
    %1201 = vmatmul.mubr.f32.gmra.mrb[0].mxu0 %v1051
    %v1202 = vpop.f32.mrb[0].mxu0
    %v1203 = vadd.f32 0.0, %v1202
    %v1204 = vpop.f32.mrb[0].mxu0
    %1205 = vmatprep.mubr.f32.mxu0 0.0
    %1206 = vmatmul.mubr.f32.gmra.mrb[0].mxu0 %v1054
    %v1207 = vpop.f32.mrb[0].mxu0
    %v1208 = vadd.f32 0.0, %v1207
    %v1209 = vpop.f32.mrb[0].mxu0
    %1210 = vmatprep.mubr.f32.mxu0 0.0
    %1211 = vmatmul.mubr.f32.gmra.mrb[0].mxu0 %v1057
    %v1212 = vpop.f32.mrb[0].mxu0
    %v1213 = vadd.f32 0.0, %v1212
    %v1214 = vpop.f32.mrb[0].mxu0
    %1215 = vmatprep.mubr.f32.mxu0 0.0
    %1216 = vmatmul.mubr.f32.gmra.mrb[0].mxu0 %v1060
    %v1217 = vpop.f32.mrb[0].mxu0
    %v1218 = vadd.f32 0.0, %v1217
    %v1219 = vpop.f32.mrb[0].mxu0
    %1220 = vmatprep.mubr.f32.mxu0 0.0
    %1221 = vmatmul.mubr.f32.gmra.mrb[0].mxu0 %v1063
    %v1222 = vpop.f32.mrb[0].mxu0
    %v1223 = vadd.f32 0.0, %v1222
    %v1224 = vpop.f32.mrb[0].mxu0
    %1225 = vmatprep.mubr.f32.mxu0 0.0
    %1226 = vmatmul.mubr.f32.gmra.mrb[0].mxu0 %v1066
    %v1227 = vpop.f32.mrb[0].mxu0
    %v1228 = vadd.f32 0.0, %v1227
    %v1229 = vpop.f32.mrb[0].mxu0
    %1230 = vmatprep.mubr.f32.mxu0 0.0
    %1231 = vmatmul.mubr.f32.gmra.mrb[0].mxu0 %v1069
    %v1232 = vpop.f32.mrb[0].mxu0
    %v1233 = vadd.f32 0.0, %v1232
    %v1234 = vpop.f32.mrb[0].mxu0
    %1235 = vmatprep.mubr.f32.mxu0 0.0
    %1236 = vmatmul.mubr.f32.gmra.mrb[0].mxu0 %v1072
    %v1237 = vpop.f32.mrb[0].mxu0
    %v1238 = vadd.f32 0.0, %v1237
    %v1239 = vpop.f32.mrb[0].mxu0
    %1240 = vmatprep.mubr.f32.mxu0 0.0
    %1241 = vmatmul.mubr.f32.gmra.mrb[0].mxu0 %v1075
    %v1242 = vpop.f32.mrb[0].mxu0
    %v1243 = vadd.f32 0.0, %v1242
    %v1244 = vpop.f32.mrb[0].mxu0
    %1245 = vmatprep.mubr.f32.mxu0 0.0
    %1246 = vmatmul.mubr.f32.gmra.mrb[0].mxu0 %v1078
    %v1247 = vpop.f32.mrb[0].mxu0
    %v1248 = vadd.f32 0.0, %v1247
    %v1249 = vpop.f32.mrb[0].mxu0
    %1250 = vmatprep.mubr.f32.mxu0 0.0
    %1251 = vmatmul.mubr.f32.gmra.mrb[0].mxu0 %v1081
    %v1252 = vpop.f32.mrb[0].mxu0
    %v1253 = vadd.f32 0.0, %v1252
    %v1254 = vpop.f32.mrb[0].mxu0
    %1255 = vmatprep.mubr.f32.mxu0 0.0
    %1256 = vmatmul.mubr.f32.gmra.mrb[0].mxu0 %v1084
    %v1257 = vpop.f32.mrb[0].mxu0
    %v1258 = vadd.f32 0.0, %v1257
    %v1259 = vpop.f32.mrb[0].mxu0
    %1260 = vmatprep.mubr.f32.mxu0 0.0
    %1261 = vmatmul.mubr.f32.gmra.mrb[0].mxu0 %v1087
    %v1262 = vpop.f32.mrb[0].mxu0
    %v1263 = vadd.f32 0.0, %v1262
    %v1264 = vpop.f32.mrb[0].mxu0
    %1265 = vmatprep.mubr.f32.mxu0 0.0
    %1266 = vmatmul.mubr.f32.gmra.mrb[0].mxu0 %v1090
    %v1267 = vpop.f32.mrb[0].mxu0
    %v1268 = vadd.f32 0.0, %v1267
    %v1269 = vpop.f32.mrb[0].mxu0
    %1270 = vmatprep.mubr.f32.mxu0 0.0
    %1271 = vmatmul.mubr.f32.gmra.mrb[0].mxu0 %v1093
    %v1272 = vpop.f32.mrb[0].mxu0
    %v1273 = vadd.f32 0.0, %v1272
    %v1274 = vpop.f32.mrb[0].mxu0
    %1275 = vmatprep.mubr.f32.mxu0 0.0
    %1276 = vmatmul.mubr.f32.gmra.mrb[0].mxu0 %v1096
    %v1277 = vpop.f32.mrb[0].mxu0
    %v1278 = vadd.f32 0.0, %v1277
    %v1279 = vpop.f32.mrb[0].mxu0
    %1280 = vmatprep.mubr.f32.mxu0 0.0
    %1281 = vmatmul.mubr.f32.gmra.mrb[0].mxu0 %v1099
    %v1282 = vpop.f32.mrb[0].mxu0
    %v1283 = vadd.f32 0.0, %v1282
    %v1284 = vpop.f32.mrb[0].mxu0
    %1285 = vdwg.mxu0
    %1287 = vset.pattern.permute.xlu0 0
    %1288 = vperm.xlu0 %1287, %v1021
    %v1289 = vpop.permute.xlu0 %1288
    %1292 = vset.pattern.permute.xlu0 0
    %1293 = vperm.xlu0 %1292, %v1022
    %v1294 = vpop.permute.xlu0 %1293
    %1297 = vset.pattern.permute.xlu0 0
    %1298 = vperm.xlu0 %1297, %v1023
    %v1299 = vpop.permute.xlu0 %1298
    %1302 = vset.pattern.permute.xlu0 0
    %1303 = vperm.xlu0 %1302, %v1024
    %v1304 = vpop.permute.xlu0 %1303
    %1307 = vset.pattern.permute.xlu0 0
    %1308 = vperm.xlu0 %1307, %v1025
    %v1309 = vpop.permute.xlu0 %1308
    %1312 = vset.pattern.permute.xlu0 0
    %1313 = vperm.xlu0 %1312, %v1026
    %v1314 = vpop.permute.xlu0 %1313
    %1317 = vset.pattern.permute.xlu0 0
    %1318 = vperm.xlu0 %1317, %v1027
    %v1319 = vpop.permute.xlu0 %1318
    %1322 = vset.pattern.permute.xlu0 0
    %1323 = vperm.xlu0 %1322, %v1028
    %v1324 = vpop.permute.xlu0 %1323
    %v1326 = vadd.f32 %v1208, %v1289
    %v1327 = vadd.f32 %v1213, %v1294
    %v1328 = vadd.f32 %v1218, %v1299
    %v1329 = vadd.f32 %v1223, %v1304
    %v1330 = vadd.f32 %v1228, %v1309
    %v1331 = vadd.f32 %v1233, %v1314
    %v1332 = vadd.f32 %v1238, %v1319
    %v1333 = vadd.f32 %v1243, %v1324
    %1334 = vrot.lane.b32.xlu0 %v1168, 1
    %v1335 = vpop.permute.xlu0 %1334
    %1336 = vrot.lane.b32.xlu0 %v1173, 1
    %v1337 = vpop.permute.xlu0 %1336
    %1338 = vrot.lane.b32.xlu0 %v1178, 1
    %v1339 = vpop.permute.xlu0 %1338
    %1340 = vrot.lane.b32.xlu0 %v1183, 1
    %v1341 = vpop.permute.xlu0 %1340
    %1342 = vrot.lane.b32.xlu0 %v1188, 1
    %v1343 = vpop.permute.xlu0 %1342
    %1344 = vrot.lane.b32.xlu0 %v1193, 1
    %v1345 = vpop.permute.xlu0 %1344
    %1346 = vrot.lane.b32.xlu0 %v1198, 1
    %v1347 = vpop.permute.xlu0 %1346
    %1348 = vrot.lane.b32.xlu0 %v1203, 1
    %v1349 = vpop.permute.xlu0 %1348
    %v1350 = vmul.f32 %v398, %v1335
    %v1351 = vmul.f32 %v398, %v1337
    %v1352 = vmul.f32 %v398, %v1339
    %v1353 = vmul.f32 %v398, %v1341
    %v1354 = vmul.f32 %v398, %v1343
    %v1355 = vmul.f32 %v398, %v1345
    %v1356 = vmul.f32 %v398, %v1347
    %v1357 = vmul.f32 %v398, %v1349
    %v1358 = vadd.f32 %v1326, %v1350
    %v1359 = vadd.f32 %v1327, %v1351
    %v1360 = vadd.f32 %v1328, %v1352
    %v1361 = vadd.f32 %v1329, %v1353
    %v1362 = vadd.f32 %v1330, %v1354
    %v1363 = vadd.f32 %v1331, %v1355
    %v1364 = vadd.f32 %v1332, %v1356
    %v1365 = vadd.f32 %v1333, %v1357
    %1366 = vrot.lane.b32.xlu0 %v1248, 127
    %v1367 = vpop.permute.xlu0 %1366
    %1368 = vrot.lane.b32.xlu0 %v1253, 127
    %v1369 = vpop.permute.xlu0 %1368
    %1370 = vrot.lane.b32.xlu0 %v1258, 127
    %v1371 = vpop.permute.xlu0 %1370
    %1372 = vrot.lane.b32.xlu0 %v1263, 127
    %v1373 = vpop.permute.xlu0 %1372
    %1374 = vrot.lane.b32.xlu0 %v1268, 127
    %v1375 = vpop.permute.xlu0 %1374
    %1376 = vrot.lane.b32.xlu0 %v1273, 127
    %v1377 = vpop.permute.xlu0 %1376
    %1378 = vrot.lane.b32.xlu0 %v1278, 127
    %v1379 = vpop.permute.xlu0 %1378
    %1380 = vrot.lane.b32.xlu0 %v1283, 127
    %v1381 = vpop.permute.xlu0 %1380
    %v1382 = vmul.f32 %v434, %v1367
    %v1383 = vmul.f32 %v434, %v1369
    %v1384 = vmul.f32 %v434, %v1371
    %v1385 = vmul.f32 %v434, %v1373
    %v1386 = vmul.f32 %v434, %v1375
    %v1387 = vmul.f32 %v434, %v1377
    %v1388 = vmul.f32 %v434, %v1379
    %v1389 = vmul.f32 %v434, %v1381
    %v1390 = vadd.f32 %v1358, %v1382
    %v1391 = vadd.f32 %v1359, %v1383
    %v1392 = vadd.f32 %v1360, %v1384
    %v1393 = vadd.f32 %v1361, %v1385
    %v1394 = vadd.f32 %v1362, %v1386
    %v1395 = vadd.f32 %v1363, %v1387
    %v1396 = vadd.f32 %v1364, %v1388
    %v1397 = vadd.f32 %v1365, %v1389
    %v1398 = vmul.f32 %v1390, 0.5
    %v1399 = vmul.f32 %v1391, 0.5
    %v1400 = vmul.f32 %v1392, 0.5
    %v1401 = vmul.f32 %v1393, 0.5
    %v1402 = vmul.f32 %v1394, 0.5
    %v1403 = vmul.f32 %v1395, 0.5
    %v1404 = vmul.f32 %v1396, 0.5
    %v1405 = vmul.f32 %v1397, 0.5
    %v1406 = vmul.f32 %v1390, %v1390
    %v1407 = vmul.f32 %v1391, %v1391
    %v1408 = vmul.f32 %v1392, %v1392
    %v1409 = vmul.f32 %v1393, %v1393
    %v1410 = vmul.f32 %v1394, %v1394
    %v1411 = vmul.f32 %v1395, %v1395
    %v1412 = vmul.f32 %v1396, %v1396
    %v1413 = vmul.f32 %v1397, %v1397
    %v1414 = vmul.f32 %v1406, %v1390
    %v1415 = vmul.f32 %v1407, %v1391
    %v1416 = vmul.f32 %v1408, %v1392
    %v1417 = vmul.f32 %v1409, %v1393
    %v1418 = vmul.f32 %v1410, %v1394
    %v1419 = vmul.f32 %v1411, %v1395
    %v1420 = vmul.f32 %v1412, %v1396
    %v1421 = vmul.f32 %v1413, %v1397
    %v1422 = vmul.f32 %v1414, 0.044715
    %v1423 = vmul.f32 %v1415, 0.044715
    %v1424 = vmul.f32 %v1416, 0.044715
    %v1425 = vmul.f32 %v1417, 0.044715
    %v1426 = vmul.f32 %v1418, 0.044715
    %v1427 = vmul.f32 %v1419, 0.044715
    %v1428 = vmul.f32 %v1420, 0.044715
    %v1429 = vmul.f32 %v1421, 0.044715
    %v1430 = vadd.f32 %v1390, %v1422
    %v1431 = vadd.f32 %v1391, %v1423
    %v1432 = vadd.f32 %v1392, %v1424
    %v1433 = vadd.f32 %v1393, %v1425
    %v1434 = vadd.f32 %v1394, %v1426
    %v1435 = vadd.f32 %v1395, %v1427
    %v1436 = vadd.f32 %v1396, %v1428
    %v1437 = vadd.f32 %v1397, %v1429
    %v1438 = vmul.f32 %v1430, 0.7978846
    %v1439 = vmul.f32 %v1431, 0.7978846
    %v1440 = vmul.f32 %v1432, 0.7978846
    %v1441 = vmul.f32 %v1433, 0.7978846
    %v1442 = vmul.f32 %v1434, 0.7978846
    %v1443 = vmul.f32 %v1435, 0.7978846
    %v1444 = vmul.f32 %v1436, 0.7978846
    %v1445 = vmul.f32 %v1437, 0.7978846
    %v1446 = vtanh.pop %v1438
    %v1447 = vtanh.pop %v1439
    %v1448 = vtanh.pop %v1440
    %v1449 = vtanh.pop %v1441
    %v1450 = vtanh.pop %v1442
    %v1451 = vtanh.pop %v1443
    %v1452 = vtanh.pop %v1444
    %v1453 = vtanh.pop %v1445
    %v1454 = vadd.f32 %v1446, 1.0
    %v1455 = vadd.f32 %v1447, 1.0
    %v1456 = vadd.f32 %v1448, 1.0
    %v1457 = vadd.f32 %v1449, 1.0
    %v1458 = vadd.f32 %v1450, 1.0
    %v1459 = vadd.f32 %v1451, 1.0
    %v1460 = vadd.f32 %v1452, 1.0
    %v1461 = vadd.f32 %v1453, 1.0
    %v1462 = vmul.f32 %v1398, %v1454
    %v1463 = vmul.f32 %v1399, %v1455
    %v1464 = vmul.f32 %v1400, %v1456
    %v1465 = vmul.f32 %v1401, %v1457
    %v1466 = vmul.f32 %v1402, %v1458
    %v1467 = vmul.f32 %v1403, %v1459
    %v1468 = vmul.f32 %v1404, %v1460
    %v1469 = vmul.f32 %v1405, %v1461
    %v1470 = vld [vmem:[#allocation7 + $0x10] sm:$0xff]
    %v1471 = vld [vmem:[#allocation7 + $0x18] sm:$0xff]
    %v1472 = vld [vmem:[#allocation7 + $0x20] sm:$0xff]
    %v1473 = vld [vmem:[#allocation7 + $0x28] sm:$0xff]
    %v1474 = vld [vmem:[#allocation7 + $0x30] sm:$0xff]
    %v1475 = vld [vmem:[#allocation7 + $0x38] sm:$0xff]
    %v1476 = vld [vmem:[#allocation7 + $0x40] sm:$0xff]
    %v1477 = vld [vmem:[#allocation7 + $0x48] sm:$0xff]
    %v1478 = vld [vmem:[#allocation7 + $0x50] sm:$0xff]
    %v1479 = vld [vmem:[#allocation7 + $0x58] sm:$0xff]
    %v1480 = vld [vmem:[#allocation7 + $0x60] sm:$0xff]
    %v1481 = vld [vmem:[#allocation7 + $0x68] sm:$0xff]
    %v1482 = vld [vmem:[#allocation7 + $0x70] sm:$0xff]
    %v1483 = vld [vmem:[#allocation7 + $0x78] sm:$0xff]
    %v1484 = vld [vmem:[#allocation7 + $0x80] sm:$0xff]
    %v1485 = vld [vmem:[#allocation7 + $0x88] sm:$0xff]
    %1486 = vmatprep.subr.mxu0 0.0
    %1487 = vmatpush1.msra.mxu0 %v1470
    %1488 = vmatprep.subr.mxu0 0.0
    %1489 = vmatpush1.msra.mxu0 %v1471
    %1490 = vmatprep.subr.mxu0 0.0
    %1491 = vmatpush1.msra.mxu0 %v1472
    %1492 = vmatprep.subr.mxu0 0.0
    %1493 = vmatpush1.msra.mxu0 %v1473
    %1494 = vmatprep.subr.mxu0 0.0
    %1495 = vmatpush1.msra.mxu0 %v1474
    %1496 = vmatprep.subr.mxu0 0.0
    %1497 = vmatpush1.msra.mxu0 %v1475
    %1498 = vmatprep.subr.mxu0 0.0
    %1499 = vmatpush1.msra.mxu0 %v1476
    %1500 = vmatprep.subr.mxu0 0.0
    %1501 = vmatpush1.msra.mxu0 %v1477
    %1502 = vmatprep.subr.mxu0 0.0
    %1503 = vmatpush1.msra.mxu0 %v1478
    %1504 = vmatprep.subr.mxu0 0.0
    %1505 = vmatpush1.msra.mxu0 %v1479
    %1506 = vmatprep.subr.mxu0 0.0
    %1507 = vmatpush1.msra.mxu0 %v1480
    %1508 = vmatprep.subr.mxu0 0.0
    %1509 = vmatpush1.msra.mxu0 %v1481
    %1510 = vmatprep.subr.mxu0 0.0
    %1511 = vmatpush1.msra.mxu0 %v1482
    %1512 = vmatprep.subr.mxu0 0.0
    %1513 = vmatpush1.msra.mxu0 %v1483
    %1514 = vmatprep.subr.mxu0 0.0
    %1515 = vmatpush1.msra.mxu0 %v1484
    %1516 = vmatprep.subr.mxu0 0.0
    %1517 = vmatpush1.msra.mxu0 %v1485
    %1518 = vmatprep.subr.mxu0 0.0
    %1519 = vmatpush1.msra.mxu0 0.0
    %1520 = vmatprep.subr.mxu0 0.0
    %1521 = vmatpush1.msra.mxu0 0.0
    %1522 = vmatprep.subr.mxu0 0.0
    %1523 = vmatpush1.msra.mxu0 0.0
    %1524 = vmatprep.subr.mxu0 0.0
    %1525 = vmatpush1.msra.mxu0 0.0
    %1526 = vmatprep.subr.mxu0 0.0
    %1527 = vmatpush1.msra.mxu0 0.0
    %1528 = vmatprep.subr.mxu0 0.0
    %1529 = vmatpush1.msra.mxu0 0.0
    %1530 = vmatprep.subr.mxu0 0.0
    %1531 = vmatpush1.msra.mxu0 0.0
    %1532 = vmatprep.subr.mxu0 0.0
    %1533 = vmatpush1.msra.mxu0 0.0
    %1534 = vmatprep.subr.mxu0 0.0
    %1535 = vmatpush1.msra.mxu0 0.0
    %1536 = vmatprep.subr.mxu0 0.0
    %1537 = vmatpush1.msra.mxu0 0.0
    %1538 = vmatprep.subr.mxu0 0.0
    %1539 = vmatpush1.msra.mxu0 0.0
    %1540 = vmatprep.subr.mxu0 0.0
    %1541 = vmatpush1.msra.mxu0 0.0
    %1542 = vmatprep.subr.mxu0 0.0
    %1543 = vmatpush1.msra.mxu0 0.0
    %1544 = vmatprep.subr.mxu0 0.0
    %1545 = vmatpush1.msra.mxu0 0.0
    %1546 = vmatprep.subr.mxu0 0.0
    %1547 = vmatpush1.msra.mxu0 0.0
    %1548 = vmatprep.subr.mxu0 0.0
    %1549 = vmatpush1.msra.mxu0 0.0
    %1550 = vmatprep.mubr.f32.mxu0 0.0
    %1551 = vmatmul.mubr.f32.gmra.mrb[0].mxu0 %v1462
    %v1552 = vpop.f32.mrb[0].mxu0
    %v1553 = vadd.f32 0.0, %v1552
    %v1554 = vpop.f32.mrb[0].mxu0
    %1555 = vmatprep.mubr.f32.mxu0 0.0
    %1556 = vmatmul.mubr.f32.gmra.mrb[0].mxu0 %v1463
    %v1557 = vpop.f32.mrb[0].mxu0
    %v1558 = vadd.f32 0.0, %v1557
    %v1559 = vpop.f32.mrb[0].mxu0
    %1560 = vmatprep.mubr.f32.mxu0 0.0
    %1561 = vmatmul.mubr.f32.gmra.mrb[0].mxu0 %v1464
    %v1562 = vpop.f32.mrb[0].mxu0
    %v1563 = vadd.f32 0.0, %v1562
    %v1564 = vpop.f32.mrb[0].mxu0
    %1565 = vmatprep.mubr.f32.mxu0 0.0
    %1566 = vmatmul.mubr.f32.gmra.mrb[0].mxu0 %v1465
    %v1567 = vpop.f32.mrb[0].mxu0
    %v1568 = vadd.f32 0.0, %v1567
    %v1569 = vpop.f32.mrb[0].mxu0
    %1570 = vmatprep.mubr.f32.mxu0 0.0
    %1571 = vmatmul.mubr.f32.gmra.mrb[0].mxu0 %v1466
    %v1572 = vpop.f32.mrb[0].mxu0
    %v1573 = vadd.f32 0.0, %v1572
    %v1574 = vpop.f32.mrb[0].mxu0
    %1575 = vmatprep.mubr.f32.mxu0 0.0
    %1576 = vmatmul.mubr.f32.gmra.mrb[0].mxu0 %v1467
    %v1577 = vpop.f32.mrb[0].mxu0
    %v1578 = vadd.f32 0.0, %v1577
    %v1579 = vpop.f32.mrb[0].mxu0
    %1580 = vmatprep.mubr.f32.mxu0 0.0
    %1581 = vmatmul.mubr.f32.gmra.mrb[0].mxu0 %v1468
    %v1582 = vpop.f32.mrb[0].mxu0
    %v1583 = vadd.f32 0.0, %v1582
    %v1584 = vpop.f32.mrb[0].mxu0
    %1585 = vmatprep.mubr.f32.mxu0 0.0
    %1586 = vmatmul.mubr.f32.gmra.mrb[0].mxu0 %v1469
    %v1587 = vpop.f32.mrb[0].mxu0
    %v1588 = vadd.f32 0.0, %v1587
    %v1589 = vpop.f32.mrb[0].mxu0
    %1590 = vdwg.mxu0
    %v1591 = vld [vmem:[#allocation2 + $0x8] sm:$0xf]
    %v1592 = vld [vmem:[#allocation7 + $0x110] sm:$0x1]
    %1594 = vset.pattern.permute.xlu0 0
    %1595 = vperm.xlu0 %1594, %v1591
    %v1596 = vpop.permute.xlu0 %1595
    %v1598 = vlaneseq
    %v1599 = vshrl.u32 %v1598, 7
    %v1600 = vsub.s32 0, %v1599
    %v1601 = vrot.slane %v1592, %v1600
    %v1602 = vmul.f32 %v1596, %v1601
    %v1603 = vld [vmem:[#allocation7 + $0x118] sm:$0x1]
    %v1604 = vlaneseq
    %v1605 = vshrl.u32 %v1604, 7
    %v1606 = vsub.s32 0, %v1605
    %v1607 = vrot.slane %v1603, %v1606
    %v1608 = vadd.f32 %v1602, %v1607
    %v1609 = vmul.f32 %v1608, 0.5
    %v1610 = vmul.f32 %v1608, %v1608
    %v1611 = vmul.f32 %v1610, %v1608
    %v1612 = vmul.f32 %v1611, 0.044715
    %v1613 = vadd.f32 %v1608, %v1612
    %v1614 = vmul.f32 %v1613, 0.7978846
    %v1615 = vtanh.pop %v1614
    %v1616 = vadd.f32 %v1615, 1.0
    %v1617 = vmul.f32 %v1609, %v1616
    %v1618 = vld [vmem:[#allocation7 + $0x120] sm:$0xff]
    %v1619 = vld [vmem:[#allocation7 + $0x128] sm:$0xff]
    %v1620 = vld [vmem:[#allocation7 + $0x130] sm:$0x1]
    %v1621 = vlaneseq
    %v1622 = vshrl.u32 %v1621, 7
    %v1623 = vsub.s32 0, %v1622
    %v1624 = vrot.slane %v1620, %v1623
    %vm1625 = vcmask 130048
    %v1627 = vsel %vm1625, %v1617, 0
    %1629 = vmatprep.subr.mxu0 0.0
    %1630 = vmatpush1.msra.mxu0 %v1618
    %1631 = vmatprep.subr.mxu0 0.0
    %1632 = vmatpush1.msra.mxu0 %v1619
    %1633 = vmatprep.subr.mxu0 0.0
    %1634 = vmatpush1.msra.mxu0 0.0
    %1635 = vmatprep.subr.mxu0 0.0
    %1636 = vmatpush1.msra.mxu0 0.0
    %1637 = vmatprep.subr.mxu0 0.0
    %1638 = vmatpush1.msra.mxu0 0.0
    %1639 = vmatprep.subr.mxu0 0.0
    %1640 = vmatpush1.msra.mxu0 0.0
    %1641 = vmatprep.subr.mxu0 0.0
    %1642 = vmatpush1.msra.mxu0 0.0
    %1643 = vmatprep.subr.mxu0 0.0
    %1644 = vmatpush1.msra.mxu0 0.0
    %1645 = vmatprep.subr.mxu0 0.0
    %1646 = vmatpush1.msra.mxu0 0.0
    %1647 = vmatprep.subr.mxu0 0.0
    %1648 = vmatpush1.msra.mxu0 0.0
    %1649 = vmatprep.subr.mxu0 0.0
    %1650 = vmatpush1.msra.mxu0 0.0
    %1651 = vmatprep.subr.mxu0 0.0
    %1652 = vmatpush1.msra.mxu0 0.0
    %1653 = vmatprep.subr.mxu0 0.0
    %1654 = vmatpush1.msra.mxu0 0.0
    %1655 = vmatprep.subr.mxu0 0.0
    %1656 = vmatpush1.msra.mxu0 0.0
    %1657 = vmatprep.subr.mxu0 0.0
    %1658 = vmatpush1.msra.mxu0 0.0
    %1659 = vmatprep.subr.mxu0 0.0
    %1660 = vmatpush1.msra.mxu0 0.0
    %1661 = vmatprep.subr.mxu0 0.0
    %1662 = vmatpush1.msra.mxu0 0.0
    %1663 = vmatprep.subr.mxu0 0.0
    %1664 = vmatpush1.msra.mxu0 0.0
    %1665 = vmatprep.subr.mxu0 0.0
    %1666 = vmatpush1.msra.mxu0 0.0
    %1667 = vmatprep.subr.mxu0 0.0
    %1668 = vmatpush1.msra.mxu0 0.0
    %1669 = vmatprep.subr.mxu0 0.0
    %1670 = vmatpush1.msra.mxu0 0.0
    %1671 = vmatprep.subr.mxu0 0.0
    %1672 = vmatpush1.msra.mxu0 0.0
    %1673 = vmatprep.subr.mxu0 0.0
    %1674 = vmatpush1.msra.mxu0 0.0
    %1675 = vmatprep.subr.mxu0 0.0
    %1676 = vmatpush1.msra.mxu0 0.0
    %1677 = vmatprep.subr.mxu0 0.0
    %1678 = vmatpush1.msra.mxu0 0.0
    %1679 = vmatprep.subr.mxu0 0.0
    %1680 = vmatpush1.msra.mxu0 0.0
    %1681 = vmatprep.subr.mxu0 0.0
    %1682 = vmatpush1.msra.mxu0 0.0
    %1683 = vmatprep.subr.mxu0 0.0
    %1684 = vmatpush1.msra.mxu0 0.0
    %1685 = vmatprep.subr.mxu0 0.0
    %1686 = vmatpush1.msra.mxu0 0.0
    %1687 = vmatprep.subr.mxu0 0.0
    %1688 = vmatpush1.msra.mxu0 0.0
    %1689 = vmatprep.subr.mxu0 0.0
    %1690 = vmatpush1.msra.mxu0 0.0
    %1691 = vmatprep.subr.mxu0 0.0
    %1692 = vmatpush1.msra.mxu0 0.0
    %1693 = vmatprep.mubr.f32.mxu0 0.0
    %1694 = vmatmul.mubr.f32.gmra.mrb[0].mxu0 %v1627
    %v1695 = vpop.f32.mrb[0].mxu0
    %v1696 = vadd.f32 %v1624, %v1695
    %v1697 = vpop.f32.mrb[0].mxu0
    %1698 = vdwg.mxu0
    %v1699 = vmul.f32 %v1696, 0.5
    %v1700 = vmul.f32 %v1696, %v1696
    %v1701 = vmul.f32 %v1700, %v1696
    %v1702 = vmul.f32 %v1701, 0.044715
    %v1703 = vadd.f32 %v1696, %v1702
    %v1704 = vmul.f32 %v1703, 0.7978846
    %v1705 = vtanh.pop %v1704
    %v1706 = vadd.f32 %v1705, 1.0
    %v1707 = vmul.f32 %v1699, %v1706
    %v1708 = vld [vmem:[#allocation5 + $0x240] sm:$0xff]
    %v1709 = vld [vmem:[#allocation5 + $0x248] sm:$0xff]
    %v1710 = vld [vmem:[#allocation5 + $0x250] sm:$0xff]
    %v1711 = vld [vmem:[#allocation5 + $0x258] sm:$0xff]
    %v1712 = vld [vmem:[#allocation5 + $0x260] sm:$0xff]
    %v1713 = vld [vmem:[#allocation5 + $0x268] sm:$0xff]
    %v1714 = vld [vmem:[#allocation5 + $0x270] sm:$0xff]
    %v1715 = vld [vmem:[#allocation5 + $0x278] sm:$0xff]
    %v1716 = vld [vmem:[#allocation5 + $0x280] sm:$0xff]
    %v1717 = vld [vmem:[#allocation5 + $0x288] sm:$0xff]
    %v1718 = vld [vmem:[#allocation5 + $0x290] sm:$0xff]
    %v1719 = vld [vmem:[#allocation5 + $0x298] sm:$0xff]
    %v1720 = vld [vmem:[#allocation5 + $0x2a0] sm:$0xff]
    %v1721 = vld [vmem:[#allocation5 + $0x2a8] sm:$0xff]
    %v1722 = vld [vmem:[#allocation5 + $0x2b0] sm:$0xff]
    %v1723 = vld [vmem:[#allocation5 + $0x2b8] sm:$0xff]
    %v1724 = vld [vmem:[#allocation5 + $0x2c0] sm:$0xff]
    %v1725 = vld [vmem:[#allocation5 + $0x2c8] sm:$0xff]
    %v1726 = vld [vmem:[#allocation7 + $0x138] sm:$0xff]
    %v1727 = vld [vmem:[#allocation7 + $0x140] sm:$0xff]
    %v1728 = vld [vmem:[#allocation7 + $0x148] sm:$0xff]
    %v1729 = vld [vmem:[#allocation7 + $0x150] sm:$0xff]
    %v1730 = vld [vmem:[#allocation7 + $0x158] sm:$0xff]
    %v1731 = vld [vmem:[#allocation7 + $0x160] sm:$0xff]
    %v1732 = vld [vmem:[#allocation7 + $0x168] sm:$0xff]
    %v1733 = vld [vmem:[#allocation7 + $0x170] sm:$0xff]
    %v1735 = vsel %vm1625, %v1707, 0
    %1737 = vmatprep.subr.mxu0 0.0
    %1738 = vmatpush1.msra.mxu0 %v1708
    %1739 = vmatprep.subr.mxu0 0.0
    %1740 = vmatpush1.msra.mxu0 %v1709
    %1741 = vmatprep.subr.mxu0 0.0
    %1742 = vmatpush1.msra.mxu0 0.0
    %1743 = vmatprep.subr.mxu0 0.0
    %1744 = vmatpush1.msra.mxu0 0.0
    %1745 = vmatprep.subr.mxu0 0.0
    %1746 = vmatpush1.msra.mxu0 0.0
    %1747 = vmatprep.subr.mxu0 0.0
    %1748 = vmatpush1.msra.mxu0 0.0
    %1749 = vmatprep.subr.mxu0 0.0
    %1750 = vmatpush1.msra.mxu0 0.0
    %1751 = vmatprep.subr.mxu0 0.0
    %1752 = vmatpush1.msra.mxu0 0.0
    %1753 = vmatprep.subr.mxu0 0.0
    %1754 = vmatpush1.msra.mxu0 0.0
    %1755 = vmatprep.subr.mxu0 0.0
    %1756 = vmatpush1.msra.mxu0 0.0
    %1757 = vmatprep.subr.mxu0 0.0
    %1758 = vmatpush1.msra.mxu0 0.0
    %1759 = vmatprep.subr.mxu0 0.0
    %1760 = vmatpush1.msra.mxu0 0.0
    %1761 = vmatprep.subr.mxu0 0.0
    %1762 = vmatpush1.msra.mxu0 0.0
    %1763 = vmatprep.subr.mxu0 0.0
    %1764 = vmatpush1.msra.mxu0 0.0
    %1765 = vmatprep.subr.mxu0 0.0
    %1766 = vmatpush1.msra.mxu0 0.0
    %1767 = vmatprep.subr.mxu0 0.0
    %1768 = vmatpush1.msra.mxu0 0.0
    %1769 = vmatprep.subr.mxu0 0.0
    %1770 = vmatpush1.msra.mxu0 0.0
    %1771 = vmatprep.subr.mxu0 0.0
    %1772 = vmatpush1.msra.mxu0 0.0
    %1773 = vmatprep.subr.mxu0 0.0
    %1774 = vmatpush1.msra.mxu0 0.0
    %1775 = vmatprep.subr.mxu0 0.0
    %1776 = vmatpush1.msra.mxu0 0.0
    %1777 = vmatprep.subr.mxu0 0.0
    %1778 = vmatpush1.msra.mxu0 0.0
    %1779 = vmatprep.subr.mxu0 0.0
    %1780 = vmatpush1.msra.mxu0 0.0
    %1781 = vmatprep.subr.mxu0 0.0
    %1782 = vmatpush1.msra.mxu0 0.0
    %1783 = vmatprep.subr.mxu0 0.0
    %1784 = vmatpush1.msra.mxu0 0.0
    %1785 = vmatprep.subr.mxu0 0.0
    %1786 = vmatpush1.msra.mxu0 0.0
    %1787 = vmatprep.subr.mxu0 0.0
    %1788 = vmatpush1.msra.mxu0 0.0
    %1789 = vmatprep.subr.mxu0 0.0
    %1790 = vmatpush1.msra.mxu0 0.0
    %1791 = vmatprep.subr.mxu0 0.0
    %1792 = vmatpush1.msra.mxu0 0.0
    %1793 = vmatprep.subr.mxu0 0.0
    %1794 = vmatpush1.msra.mxu0 0.0
    %1795 = vmatprep.subr.mxu0 0.0
    %1796 = vmatpush1.msra.mxu0 0.0
    %1797 = vmatprep.subr.mxu0 0.0
    %1798 = vmatpush1.msra.mxu0 0.0
    %1799 = vmatprep.subr.mxu0 0.0
    %1800 = vmatpush1.msra.mxu0 0.0
    %1801 = vmatprep.mubr.f32.mxu0 0.0
    %1802 = vmatmul.mubr.f32.gmra.mrb[0].mxu0 %v1735
    %v1803 = vpop.f32.mrb[0].mxu0
    %v1804 = vadd.f32 0.0, %v1803
    %v1805 = vpop.f32.mrb[0].mxu0
    %1806 = vdwg.mxu0
    %1807 = vxpose.xlu0.b32.start [1/16] %v1553, 128
    %1808 = vxpose.xlu0.b32.cont [2/16] %v1558, 128
    %1809 = vxpose.xlu0.b32.cont [3/16] %v1563, 128
    %1810 = vxpose.xlu0.b32.cont [4/16] %v1568, 128
    %1811 = vxpose.xlu0.b32.cont [5/16] %v1573, 128
    %1812 = vxpose.xlu0.b32.cont [6/16] %v1578, 128
    %1813 = vxpose.xlu0.b32.cont [7/16] %v1583, 128
    %1814 = vxpose.xlu0.b32.cont [8/16] %v1588, 128
    %1815 = vxpose.xlu0.b32.cont [9/16] 0.0, 128
    %1816 = vxpose.xlu0.b32.cont [10/16] 0.0, 128
    %1817 = vxpose.xlu0.b32.cont [11/16] 0.0, 128
    %1818 = vxpose.xlu0.b32.cont [12/16] 0.0, 128
    %1819 = vxpose.xlu0.b32.cont [13/16] 0.0, 128
    %1820 = vxpose.xlu0.b32.cont [14/16] 0.0, 128
    %1821 = vxpose.xlu0.b32.cont [15/16] 0.0, 128
    %1822 = vxpose.xlu0.b32.end [16/16] 0.0, 128
    %v1823 = vpop.trf.xlu0
    %v1824 = vpop.trf.xlu0
    %v1825 = vpop.trf.xlu0
    %v1826 = vpop.trf.xlu0
    %v1827 = vpop.trf.xlu0
    %v1828 = vpop.trf.xlu0
    %v1829 = vpop.trf.xlu0
    %v1830 = vpop.trf.xlu0
    %v1831 = vpop.trf.xlu0
    %v1832 = vpop.trf.xlu0
    %v1833 = vpop.trf.xlu0
    %v1834 = vpop.trf.xlu0
    %v1835 = vpop.trf.xlu0
    %v1836 = vpop.trf.xlu0
    %v1837 = vpop.trf.xlu0
    %v1838 = vpop.trf.xlu0
    %v1840 = vsel %vm555, %v1823, 0
    %1842 = vmatprep.subr.mxu0 0.0
    %1843 = vmatpush1.msra.mxu0 %v1726
    %1844 = vmatprep.subr.mxu0 0.0
    %1845 = vmatpush1.msra.mxu0 %v1727
    %1846 = vmatprep.subr.mxu0 0.0
    %1847 = vmatpush1.msra.mxu0 %v1728
    %1848 = vmatprep.subr.mxu0 0.0
    %1849 = vmatpush1.msra.mxu0 %v1729
    %1850 = vmatprep.subr.mxu0 0.0
    %1851 = vmatpush1.msra.mxu0 %v1730
    %1852 = vmatprep.subr.mxu0 0.0
    %1853 = vmatpush1.msra.mxu0 %v1731
    %1854 = vmatprep.subr.mxu0 0.0
    %1855 = vmatpush1.msra.mxu0 %v1732
    %1856 = vmatprep.subr.mxu0 0.0
    %1857 = vmatpush1.msra.mxu0 %v1733
    %1858 = vmatprep.subr.mxu0 0.0
    %1859 = vmatpush1.msra.mxu0 0.0
    %1860 = vmatprep.subr.mxu0 0.0
    %1861 = vmatpush1.msra.mxu0 0.0
    %1862 = vmatprep.subr.mxu0 0.0
    %1863 = vmatpush1.msra.mxu0 0.0
    %1864 = vmatprep.subr.mxu0 0.0
    %1865 = vmatpush1.msra.mxu0 0.0
    %1866 = vmatprep.subr.mxu0 0.0
    %1867 = vmatpush1.msra.mxu0 0.0
    %1868 = vmatprep.subr.mxu0 0.0
    %1869 = vmatpush1.msra.mxu0 0.0
    %1870 = vmatprep.subr.mxu0 0.0
    %1871 = vmatpush1.msra.mxu0 0.0
    %1872 = vmatprep.subr.mxu0 0.0
    %1873 = vmatpush1.msra.mxu0 0.0
    %1874 = vmatprep.subr.mxu0 0.0
    %1875 = vmatpush1.msra.mxu0 0.0
    %1876 = vmatprep.subr.mxu0 0.0
    %1877 = vmatpush1.msra.mxu0 0.0
    %1878 = vmatprep.subr.mxu0 0.0
    %1879 = vmatpush1.msra.mxu0 0.0
    %1880 = vmatprep.subr.mxu0 0.0
    %1881 = vmatpush1.msra.mxu0 0.0
    %1882 = vmatprep.subr.mxu0 0.0
    %1883 = vmatpush1.msra.mxu0 0.0
    %1884 = vmatprep.subr.mxu0 0.0
    %1885 = vmatpush1.msra.mxu0 0.0
    %1886 = vmatprep.subr.mxu0 0.0
    %1887 = vmatpush1.msra.mxu0 0.0
    %1888 = vmatprep.subr.mxu0 0.0
    %1889 = vmatpush1.msra.mxu0 0.0
    %1890 = vmatprep.subr.mxu0 0.0
    %1891 = vmatpush1.msra.mxu0 0.0
    %1892 = vmatprep.subr.mxu0 0.0
    %1893 = vmatpush1.msra.mxu0 0.0
    %1894 = vmatprep.subr.mxu0 0.0
    %1895 = vmatpush1.msra.mxu0 0.0
    %1896 = vmatprep.subr.mxu0 0.0
    %1897 = vmatpush1.msra.mxu0 0.0
    %1898 = vmatprep.subr.mxu0 0.0
    %1899 = vmatpush1.msra.mxu0 0.0
    %1900 = vmatprep.subr.mxu0 0.0
    %1901 = vmatpush1.msra.mxu0 0.0
    %1902 = vmatprep.subr.mxu0 0.0
    %1903 = vmatpush1.msra.mxu0 0.0
    %1904 = vmatprep.subr.mxu0 0.0
    %1905 = vmatpush1.msra.mxu0 0.0
    %1906 = vmatprep.mubr.f32.mxu0 0.0
    %1907 = vmatmul.mubr.f32.gmra.mrb[0].mxu0 %v1840
    %v1908 = vpop.f32.mrb[0].mxu0
    %v1909 = vadd.f32 %v1804, %v1908
    %v1910 = vpop.f32.mrb[0].mxu0
    %1911 = vdwg.mxu0
    %v1912 = vld [vmem:[#allocation7 + $0x178] sm:$0x1]
    %v1913 = vlaneseq
    %v1914 = vshrl.u32 %v1913, 7
    %v1915 = vsub.s32 0, %v1914
    %v1916 = vrot.slane %v1912, %v1915
    %v1917 = vadd.f32 %v1909, %v1916
    %v1918 = vmul.f32 %v1917, 0.5
    %v1919 = vmul.f32 %v1917, %v1917
    %v1920 = vmul.f32 %v1919, %v1917
    %v1921 = vmul.f32 %v1920, 0.044715
    %v1922 = vadd.f32 %v1917, %v1921
    %v1923 = vmul.f32 %v1922, 0.7978846
    %v1924 = vtanh.pop %v1923
    %v1925 = vadd.f32 %v1924, 1.0
    %v1926 = vmul.f32 %v1918, %v1925
    %v1927 = vld [vmem:[#allocation7 + $0x180] sm:$0x1]
    %v1928 = vlaneseq
    %v1929 = vshrl.u32 %v1928, 7
    %v1930 = vsub.s32 0, %v1929
    %v1931 = vrot.slane %v1927, %v1930
    %1932 = vmatprep.subr.mxu0 0.0
    %1933 = vmatpush1.msra.mxu0 %v1710
    %1934 = vmatprep.subr.mxu0 0.0
    %1935 = vmatpush1.msra.mxu0 %v1711
    %1936 = vmatprep.subr.mxu0 0.0
    %1937 = vmatpush1.msra.mxu0 %v1712
    %1938 = vmatprep.subr.mxu0 0.0
    %1939 = vmatpush1.msra.mxu0 %v1713
    %1940 = vmatprep.subr.mxu0 0.0
    %1941 = vmatpush1.msra.mxu0 %v1714
    %1942 = vmatprep.subr.mxu0 0.0
    %1943 = vmatpush1.msra.mxu0 %v1715
    %1944 = vmatprep.subr.mxu0 0.0
    %1945 = vmatpush1.msra.mxu0 %v1716
    %1946 = vmatprep.subr.mxu0 0.0
    %1947 = vmatpush1.msra.mxu0 %v1717
    %1948 = vmatprep.subr.mxu0 0.0
    %1949 = vmatpush1.msra.mxu0 %v1718
    %1950 = vmatprep.subr.mxu0 0.0
    %1951 = vmatpush1.msra.mxu0 %v1719
    %1952 = vmatprep.subr.mxu0 0.0
    %1953 = vmatpush1.msra.mxu0 %v1720
    %1954 = vmatprep.subr.mxu0 0.0
    %1955 = vmatpush1.msra.mxu0 %v1721
    %1956 = vmatprep.subr.mxu0 0.0
    %1957 = vmatpush1.msra.mxu0 %v1722
    %1958 = vmatprep.subr.mxu0 0.0
    %1959 = vmatpush1.msra.mxu0 %v1723
    %1960 = vmatprep.subr.mxu0 0.0
    %1961 = vmatpush1.msra.mxu0 %v1724
    %1962 = vmatprep.subr.mxu0 0.0
    %1963 = vmatpush1.msra.mxu0 %v1725
    %1964 = vmatprep.subr.mxu0 0.0
    %1965 = vmatpush1.msra.mxu0 0.0
    %1966 = vmatprep.subr.mxu0 0.0
    %1967 = vmatpush1.msra.mxu0 0.0
    %1968 = vmatprep.subr.mxu0 0.0
    %1969 = vmatpush1.msra.mxu0 0.0
    %1970 = vmatprep.subr.mxu0 0.0
    %1971 = vmatpush1.msra.mxu0 0.0
    %1972 = vmatprep.subr.mxu0 0.0
    %1973 = vmatpush1.msra.mxu0 0.0
    %1974 = vmatprep.subr.mxu0 0.0
    %1975 = vmatpush1.msra.mxu0 0.0
    %1976 = vmatprep.subr.mxu0 0.0
    %1977 = vmatpush1.msra.mxu0 0.0
    %1978 = vmatprep.subr.mxu0 0.0
    %1979 = vmatpush1.msra.mxu0 0.0
    %1980 = vmatprep.subr.mxu0 0.0
    %1981 = vmatpush1.msra.mxu0 0.0
    %1982 = vmatprep.subr.mxu0 0.0
    %1983 = vmatpush1.msra.mxu0 0.0
    %1984 = vmatprep.subr.mxu0 0.0
    %1985 = vmatpush1.msra.mxu0 0.0
    %1986 = vmatprep.subr.mxu0 0.0
    %1987 = vmatpush1.msra.mxu0 0.0
    %1988 = vmatprep.subr.mxu0 0.0
    %1989 = vmatpush1.msra.mxu0 0.0
    %1990 = vmatprep.subr.mxu0 0.0
    %1991 = vmatpush1.msra.mxu0 0.0
    %1992 = vmatprep.subr.mxu0 0.0
    %1993 = vmatpush1.msra.mxu0 0.0
    %1994 = vmatprep.subr.mxu0 0.0
    %1995 = vmatpush1.msra.mxu0 0.0
    %1996 = vmatprep.mubr.f32.mxu0 0.0
    %1997 = vmatmul.mubr.f32.gmra.mrb[0].mxu0 %v1926
    %v1998 = vpop.f32.mrb[0].mxu0
    %v1999 = vadd.f32 %v1931, %v1998
    %v2000 = vpop.f32.mrb[0].mxu0
    %2001 = vdwg.mxu0
    %v2002 = vmul.f32 %v1999, 0.5
    %v2003 = vmul.f32 %v1999, %v1999
    %v2004 = vmul.f32 %v2003, %v1999
    %v2005 = vmul.f32 %v2004, 0.044715
    %v2006 = vadd.f32 %v1999, %v2005
    %v2007 = vmul.f32 %v2006, 0.7978846
    %v2008 = vtanh.pop %v2007
    %v2009 = vadd.f32 %v2008, 1.0
    %v2010 = vmul.f32 %v2002, %v2009
    %v2011 = vld [vmem:[#allocation7 + $0x188] sm:$0xff]
    %v2012 = vld [vmem:[#allocation7 + $0x190] sm:$0xff]
    %v2013 = vld [vmem:[#allocation7 + $0x198] sm:$0xff]
    %v2014 = vld [vmem:[#allocation7 + $0x1a0] sm:$0xff]
    %v2015 = vld [vmem:[#allocation7 + $0x1a8] sm:$0xff]
    %v2016 = vld [vmem:[#allocation7 + $0x1b0] sm:$0xff]
    %v2017 = vld [vmem:[#allocation7 + $0x1b8] sm:$0xff]
    %v2018 = vld [vmem:[#allocation7 + $0x1c0] sm:$0xff]
    %v2019 = vld [vmem:[#allocation7 + $0x1c8] sm:$0xff]
    %v2020 = vld [vmem:[#allocation7 + $0x1d0] sm:$0xff]
    %v2021 = vld [vmem:[#allocation7 + $0x1d8] sm:$0xff]
    %v2022 = vld [vmem:[#allocation7 + $0x1e0] sm:$0xff]
    %v2023 = vld [vmem:[#allocation7 + $0x1e8] sm:$0xff]
    %v2024 = vld [vmem:[#allocation7 + $0x1f0] sm:$0xff]
    %v2025 = vld [vmem:[#allocation7 + $0x1f8] sm:$0xff]
    %v2026 = vld [vmem:[#allocation7 + $0x200] sm:$0xff]
    %v2027 = vld [vmem:[#allocation7 + $0x208] sm:$0x1]
    %v2028 = vlaneseq
    %v2029 = vshrl.u32 %v2028, 7
    %v2030 = vsub.s32 0, %v2029
    %v2031 = vrot.slane %v2027, %v2030
    %2032 = vmatprep.subr.mxu0 0.0
    %2033 = vmatpush1.msra.mxu0 %v2011
    %2034 = vmatprep.subr.mxu0 0.0
    %2035 = vmatpush1.msra.mxu0 %v2012
    %2036 = vmatprep.subr.mxu0 0.0
    %2037 = vmatpush1.msra.mxu0 %v2013
    %2038 = vmatprep.subr.mxu0 0.0
    %2039 = vmatpush1.msra.mxu0 %v2014
    %2040 = vmatprep.subr.mxu0 0.0
    %2041 = vmatpush1.msra.mxu0 %v2015
    %2042 = vmatprep.subr.mxu0 0.0
    %2043 = vmatpush1.msra.mxu0 %v2016
    %2044 = vmatprep.subr.mxu0 0.0
    %2045 = vmatpush1.msra.mxu0 %v2017
    %2046 = vmatprep.subr.mxu0 0.0
    %2047 = vmatpush1.msra.mxu0 %v2018
    %2048 = vmatprep.subr.mxu0 0.0
    %2049 = vmatpush1.msra.mxu0 %v2019
    %2050 = vmatprep.subr.mxu0 0.0
    %2051 = vmatpush1.msra.mxu0 %v2020
    %2052 = vmatprep.subr.mxu0 0.0
    %2053 = vmatpush1.msra.mxu0 %v2021
    %2054 = vmatprep.subr.mxu0 0.0
    %2055 = vmatpush1.msra.mxu0 %v2022
    %2056 = vmatprep.subr.mxu0 0.0
    %2057 = vmatpush1.msra.mxu0 %v2023
    %2058 = vmatprep.subr.mxu0 0.0
    %2059 = vmatpush1.msra.mxu0 %v2024
    %2060 = vmatprep.subr.mxu0 0.0
    %2061 = vmatpush1.msra.mxu0 %v2025
    %2062 = vmatprep.subr.mxu0 0.0
    %2063 = vmatpush1.msra.mxu0 %v2026
    %2064 = vmatprep.subr.mxu0 0.0
    %2065 = vmatpush1.msra.mxu0 0.0
    %2066 = vmatprep.subr.mxu0 0.0
    %2067 = vmatpush1.msra.mxu0 0.0
    %2068 = vmatprep.subr.mxu0 0.0
    %2069 = vmatpush1.msra.mxu0 0.0
    %2070 = vmatprep.subr.mxu0 0.0
    %2071 = vmatpush1.msra.mxu0 0.0
    %2072 = vmatprep.subr.mxu0 0.0
    %2073 = vmatpush1.msra.mxu0 0.0
    %2074 = vmatprep.subr.mxu0 0.0
    %2075 = vmatpush1.msra.mxu0 0.0
    %2076 = vmatprep.subr.mxu0 0.0
    %2077 = vmatpush1.msra.mxu0 0.0
    %2078 = vmatprep.subr.mxu0 0.0
    %2079 = vmatpush1.msra.mxu0 0.0
    %2080 = vmatprep.subr.mxu0 0.0
    %2081 = vmatpush1.msra.mxu0 0.0
    %2082 = vmatprep.subr.mxu0 0.0
    %2083 = vmatpush1.msra.mxu0 0.0
    %2084 = vmatprep.subr.mxu0 0.0
    %2085 = vmatpush1.msra.mxu0 0.0
    %2086 = vmatprep.subr.mxu0 0.0
    %2087 = vmatpush1.msra.mxu0 0.0
    %2088 = vmatprep.subr.mxu0 0.0
    %2089 = vmatpush1.msra.mxu0 0.0
    %2090 = vmatprep.subr.mxu0 0.0
    %2091 = vmatpush1.msra.mxu0 0.0
    %2092 = vmatprep.subr.mxu0 0.0
    %2093 = vmatpush1.msra.mxu0 0.0
    %2094 = vmatprep.subr.mxu0 0.0
    %2095 = vmatpush1.msra.mxu0 0.0
    %2096 = vmatprep.mubr.f32.mxu0 0.0
    %2097 = vmatmul.mubr.f32.gmra.mrb[0].mxu0 %v2010
    %v2098 = vpop.f32.mrb[0].mxu0
    %v2099 = vadd.f32 %v2031, %v2098
    %v2100 = vpop.f32.mrb[0].mxu0
    %2101 = vdwg.mxu0
    %vm2102 = vcmask 257024
    %2103 = vst.msk [vmem:[#allocation8] sm:$0xf] %vm2102, %v2099
    // Predicated region
    $region26: #{tpu_custom_call.1} parent=1 // pred_check
      _
    $region27: #{tpu_custom_call.1} parent=1 // pred_check_branch
      %2105 = sbr.rel (0) target = $region29
    $region28: #{tpu_custom_call.1} parent=1 // pred_region
      %s2107 = ssub.s32 64, 64
      %2108 = vsyncadd [#allocation4], %s2107
      %s2110 = sshll.u32 [#allocation8], 4
      %s2111 = int_to_ptr.vmem [resolvable:$true] %s2110
      %2113 = dma.vmem_to_hbm [thread:$0]  %s2111, 64, %s3, [#allocation4]
    $region29: #{tpu_custom_call.1} parent=1 // pred_fallthru
      _
    // Predicated region
    $region30: #{tpu_custom_call.1} parent=1 // pred_check
      _
    $region31: #{tpu_custom_call.1} parent=1 // pred_check_branch
      %2115 = sbr.rel (0) target = $region33
    $region32: #{tpu_custom_call.1} parent=1 // pred_region
      %2116 = dma.done [#allocation4], 64
    $region33: #{tpu_custom_call.1} parent=1 // pred_fallthru
      _
    %2117 = vsyncpa [#allocation3], 1
    %2118 = vsyncpa [#allocation6], 1
    %2119 = vsyncpa [#allocation4], 1

</llo_original>
